<compile_context>
chip_gen: v7x
topology: tpu7x:2x2x1
jax: 0.10.0
libtpu: 0.0.40
codegen_flags: <defaults>
</compile_context>

<pallas_src>
import functools

import jax
import jax.numpy as jnp
from jax.experimental import pallas as pl
from jax.experimental.pallas import tpu as pltpu


# ----------------------------------------------------------------------------
# Pallas kernels
# ----------------------------------------------------------------------------
def _pool_conv3x3_kernel(x_ref, w_ref, b_ref, y_ref, s_ref, q_ref, pad_ref, *,
                         hp, wp, cin):
    """Fused MaxPool2d(2) + Conv2d(3x3, s=1, p=1) + bias + partial BN stats.

    x_ref  : (1, 2*hp, wp, 2*cin)  input image, W-pairs folded into lanes
    w_ref  : (9*cin, cout) bf16    folded 3x3 weights (tap-major, channel-minor)
    b_ref  : (1, cout)             conv bias
    y_ref  : (1, hp*wp, cout)      pre-BN conv output
    s_ref  : (1, 1, cout)          per-image channel sums       (for BN)
    q_ref  : (1, 1, cout)          per-image channel sum-of-sq  (for BN)
    pad_ref: (hp+2, wp+2, cin)     VMEM scratch: zero-padded pooled activation
    """
    x = x_ref[0]                                              # (2hp, wp, 2cin)

    # 2x2 max pool entirely in VMEM (no pooled tensor ever hits HBM).
    wmax = jnp.maximum(x[:, :, :cin], x[:, :, cin:])          # max over W pairs
    wmax = wmax.reshape(hp, 2, wp, cin)
    pooled = jnp.maximum(wmax[:, 0, :, :], wmax[:, 1, :, :])  # max over H pairs

    # Zero-pad (padding=1) into VMEM scratch.
    pad_ref[...] = jnp.zeros_like(pad_ref)
    pad_ref[1:hp + 1, 1:wp + 1, :] = pooled

    # Fold the 9 taps into the contraction dim: one (hp*wp, 9*cin) matmul.
    taps = [pad_ref[dh:dh + hp, dw:dw + wp, :]
            for dh in range(3) for dw in range(3)]
    patches = jnp.concatenate(taps, axis=-1).reshape(hp * wp, 9 * cin)

    acc = jnp.dot(patches.astype(jnp.bfloat16), w_ref[...],
                  preferred_element_type=jnp.float32)
    acc = acc + b_ref[...]

    y_ref[0] = acc
    s_ref[0] = jnp.sum(acc, axis=0, keepdims=True)
    q_ref[0] = jnp.sum(acc * acc, axis=0, keepdims=True)


def _bnrelu_conv3x3_kernel(y_ref, a_ref, c_ref, w_ref, b_ref,
                           o_ref, s_ref, q_ref, pad_ref, *, hp, wp, cin):
    """Fused BN-apply + ReLU (of previous conv) + Conv2d(3x3, s=1, p=1) + stats.

    y_ref  : (1, hp*wp, cin)   previous conv output (pre-BN)
    a_ref  : (1, cin)          BN scale  = gamma * rsqrt(var + eps)
    c_ref  : (1, cin)          BN shift  = beta - mean * scale
    w_ref  : (9*cin, cout) bf16, b_ref: (1, cout)
    o_ref  : (1, hp*wp, cout)  pre-BN conv2 output
    s_ref/q_ref : (1, 1, cout) per-image channel sum / sum-of-squares
    pad_ref: (hp+2, wp+2, cin) VMEM scratch
    """
    z = jnp.maximum(y_ref[0] * a_ref[...] + c_ref[...], 0.0)  # BN + ReLU

    pad_ref[...] = jnp.zeros_like(pad_ref)
    pad_ref[1:hp + 1, 1:wp + 1, :] = z.reshape(hp, wp, cin)

    taps = [pad_ref[dh:dh + hp, dw:dw + wp, :]
            for dh in range(3) for dw in range(3)]
    patches = jnp.concatenate(taps, axis=-1).reshape(hp * wp, 9 * cin)

    acc = jnp.dot(patches.astype(jnp.bfloat16), w_ref[...],
                  preferred_element_type=jnp.float32)
    acc = acc + b_ref[...]

    o_ref[0] = acc
    s_ref[0] = jnp.sum(acc, axis=0, keepdims=True)
    q_ref[0] = jnp.sum(acc * acc, axis=0, keepdims=True)


def _bnrelu_kernel(y_ref, a_ref, c_ref, o_ref):
    """Final BatchNorm apply (precomputed per-channel scale/shift) + ReLU."""
    o_ref[0] = jnp.maximum(y_ref[0] * a_ref[...] + c_ref[...], 0.0)


# ----------------------------------------------------------------------------
# Pallas wrappers
# ----------------------------------------------------------------------------
_VMEM_LIMIT = 32 * 1024 * 1024  # fits v5e/v6e/v7x scoped VMEM budgets


def _fold_w(w_oihw):
    """(Cout, Cin, 3, 3) -> (9*Cin, Cout), tap-major / channel-minor, bf16."""
    cout, cin = w_oihw.shape[0], w_oihw.shape[1]
    return (jnp.transpose(w_oihw, (2, 3, 1, 0))
            .reshape(9 * cin, cout).astype(jnp.bfloat16))


def pool_conv3x3(x_nhwc, w_oihw, b):
    """MaxPool2d(2) + Conv2d(Cin, Cout, 3, s=1, p=1) + bias + partial BN stats."""
    n, h, w, cin = x_nhwc.shape
    hp, wp = h // 2, w // 2
    m = hp * wp
    cout = w_oihw.shape[0]

    xr = x_nhwc.reshape(n, h, wp, 2 * cin)        # fold W pairs into lanes (free)
    wk = _fold_w(w_oihw)
    bk = b.reshape(1, cout).astype(jnp.float32)

    kern = functools.partial(_pool_conv3x3_kernel, hp=hp, wp=wp, cin=cin)
    flops = 2 * n * m * 9 * cin * cout
    bytes_acc = (xr.size * 4 + wk.size * 2 + bk.size * 4
                 + n * m * cout * 4 + 2 * n * cout * 4)

    return pl.pallas_call(
        kern,
        out_shape=(jax.ShapeDtypeStruct((n, m, cout), jnp.float32),
                   jax.ShapeDtypeStruct((n, 1, cout), jnp.float32),
                   jax.ShapeDtypeStruct((n, 1, cout), jnp.float32)),
        grid=(n,),
        in_specs=[
            pl.BlockSpec((1, h, wp, 2 * cin), lambda i: (i, 0, 0, 0)),
            pl.BlockSpec((9 * cin, cout), lambda i: (0, 0)),
            pl.BlockSpec((1, cout), lambda i: (0, 0)),
        ],
        out_specs=(
            pl.BlockSpec((1, m, cout), lambda i: (i, 0, 0)),
            pl.BlockSpec((1, 1, cout), lambda i: (i, 0, 0)),
            pl.BlockSpec((1, 1, cout), lambda i: (i, 0, 0)),
        ),
        scratch_shapes=[pltpu.VMEM((hp + 2, wp + 2, cin), jnp.float32)],
        compiler_params=pltpu.CompilerParams(
            dimension_semantics=("parallel",),
            vmem_limit_bytes=_VMEM_LIMIT),
        cost_estimate=pl.CostEstimate(flops=flops, transcendentals=0,
                                      bytes_accessed=bytes_acc),
    )(xr, wk, bk)


def bnrelu_conv3x3(y, a, c, w_oihw, b, hp, wp):
    """BN-apply + ReLU fused into Conv2d(3x3, s=1, p=1) + bias + partial BN stats."""
    n, m, cin = y.shape
    cout = w_oihw.shape[0]

    wk = _fold_w(w_oihw)
    ak = a.reshape(1, cin).astype(jnp.float32)
    ck = c.reshape(1, cin).astype(jnp.float32)
    bk = b.reshape(1, cout).astype(jnp.float32)

    kern = functools.partial(_bnrelu_conv3x3_kernel, hp=hp, wp=wp, cin=cin)
    flops = 2 * n * m * 9 * cin * cout
    bytes_acc = (y.size * 4 + wk.size * 2 + (ak.size + ck.size + bk.size) * 4
                 + n * m * cout * 4 + 2 * n * cout * 4)

    return pl.pallas_call(
        kern,
        out_shape=(jax.ShapeDtypeStruct((n, m, cout), jnp.float32),
                   jax.ShapeDtypeStruct((n, 1, cout), jnp.float32),
                   jax.ShapeDtypeStruct((n, 1, cout), jnp.float32)),
        grid=(n,),
        in_specs=[
            pl.BlockSpec((1, m, cin), lambda i: (i, 0, 0)),
            pl.BlockSpec((1, cin), lambda i: (0, 0)),
            pl.BlockSpec((1, cin), lambda i: (0, 0)),
            pl.BlockSpec((9 * cin, cout), lambda i: (0, 0)),
            pl.BlockSpec((1, cout), lambda i: (0, 0)),
        ],
        out_specs=(
            pl.BlockSpec((1, m, cout), lambda i: (i, 0, 0)),
            pl.BlockSpec((1, 1, cout), lambda i: (i, 0, 0)),
            pl.BlockSpec((1, 1, cout), lambda i: (i, 0, 0)),
        ),
        scratch_shapes=[pltpu.VMEM((hp + 2, wp + 2, cin), jnp.float32)],
        compiler_params=pltpu.CompilerParams(
            dimension_semantics=("parallel",),
            vmem_limit_bytes=_VMEM_LIMIT),
        cost_estimate=pl.CostEstimate(flops=flops, transcendentals=0,
                                      bytes_accessed=bytes_acc),
    )(y, ak, ck, wk, bk)


def bnrelu_apply(y, a, c):
    n, m, ch = y.shape
    ak = a.reshape(1, ch).astype(jnp.float32)
    ck = c.reshape(1, ch).astype(jnp.float32)
    return pl.pallas_call(
        _bnrelu_kernel,
        out_shape=jax.ShapeDtypeStruct((n, m, ch), jnp.float32),
        grid=(n,),
        in_specs=[
            pl.BlockSpec((1, m, ch), lambda i: (i, 0, 0)),
            pl.BlockSpec((1, ch), lambda i: (0, 0)),
            pl.BlockSpec((1, ch), lambda i: (0, 0)),
        ],
        out_specs=pl.BlockSpec((1, m, ch), lambda i: (i, 0, 0)),
        compiler_params=pltpu.CompilerParams(
            dimension_semantics=("parallel",),
            vmem_limit_bytes=_VMEM_LIMIT),
    )(y, ak, ck)


# ----------------------------------------------------------------------------
# DownSample forward (Pallas version)
# ----------------------------------------------------------------------------
def downsample_forward(params, x_nchw):
    eps = 1e-5
    x = jnp.transpose(x_nchw, (0, 2, 3, 1))       # NCHW -> NHWC
    n, h, w, _ = x.shape
    hp, wp = h // 2, w // 2
    m = hp * wp
    cnt = n * m

    # MaxPool2d(2) + conv1 + bias (+ per-image channel sum/sumsq), one kernel.
    y1, s1, q1 = pool_conv3x3(x, params["w1"], params["b1"])
    mean1 = jnp.sum(s1, axis=0)[0] / cnt
    var1 = jnp.sum(q1, axis=0)[0] / cnt - mean1 * mean1
    a1 = params["g1"] * jax.lax.rsqrt(var1 + eps)
    c1 = params["be1"] - mean1 * a1

    # BN1-apply + ReLU fused into conv2's input read; conv2 + bias + stats.
    y2, s2, q2 = bnrelu_conv3x3(y1, a1, c1, params["w2"], params["b2"], hp, wp)
    mean2 = jnp.sum(s2, axis=0)[0] / cnt
    var2 = jnp.sum(q2, axis=0)[0] / cnt - mean2 * mean2
    a2 = params["g2"] * jax.lax.rsqrt(var2 + eps)
    c2 = params["be2"] - mean2 * a2

    out = bnrelu_apply(y2, a2, c2)                # (N, Hp*Wp, Cout)
    cout = out.shape[-1]
    out = out.reshape(n, hp, wp, cout)
    return jnp.transpose(out, (0, 3, 1, 2))       # NHWC -> NCHW


# ----------------------------------------------------------------------------
# Pure-JAX reference (matches PyTorch semantics, training-mode BatchNorm)
# ----------------------------------------------------------------------------
def reference_forward(params, x):
    n, c, h, w = x.shape
    p = x.reshape(n, c, h // 2, 2, w // 2, 2).max(axis=(3, 5))   # MaxPool2d(2)

    def conv_bn_relu(t, wgt, b, g, be):
        out = jax.lax.conv_general_dilated(
            t, wgt, window_strides=(1, 1), padding=((1, 1), (1, 1)),
            dimension_numbers=("NCHW", "OIHW", "NCHW"),
            precision=jax.lax.Precision.HIGHEST)
        out = out + b[None, :, None, None]
        mean = jnp.mean(out, axis=(0, 2, 3), keepdims=True)
        var = jnp.mean((out - mean) ** 2, axis=(0, 2, 3), keepdims=True)
        out = (out - mean) * jax.lax.rsqrt(var + 1e-5)
        out = out * g[None, :, None, None] + be[None, :, None, None]
        return jnp.maximum(out, 0.0)

    t = conv_bn_relu(p, params["w1"], params["b1"], params["g1"], params["be1"])
    t = conv_bn_relu(t, params["w2"], params["b2"], params["g2"], params["be2"])
    return t


# ----------------------------------------------------------------------------
if __name__ == "__main__":
    in_channels, out_channels = 4, 8

    key = jax.random.PRNGKey(0)
    ks = jax.random.split(key, 12)
    f32 = jnp.float32
    params = {
        # DoubleConv conv1: Conv2d(in, out, 3, s=1, p=1), weight (Cout, Cin, 3, 3)
        "w1": 0.2 * jax.random.normal(ks[0], (out_channels, in_channels, 3, 3), f32),
        "b1": 0.1 * jax.random.normal(ks[1], (out_channels,), f32),
        "g1": 1.0 + 0.1 * jax.random.normal(ks[2], (out_channels,), f32),
        "be1": 0.1 * jax.random.normal(ks[3], (out_channels,), f32),
        # DoubleConv conv2: Conv2d(out, out, 3, s=1, p=1)
        "w2": 0.2 * jax.random.normal(ks[4], (out_channels, out_channels, 3, 3), f32),
        "b2": 0.1 * jax.random.normal(ks[5], (out_channels,), f32),
        "g2": 1.0 + 0.1 * jax.random.normal(ks[6], (out_channels,), f32),
        "be2": 0.1 * jax.random.normal(ks[7], (out_channels,), f32),
    }

    x = jax.random.normal(ks[10], (2, in_channels, 16, 16), f32)   # NCHW

    out = jax.jit(downsample_forward)(params, x)
    out = jax.block_until_ready(out)
    assert out.shape == (2, out_channels, 8, 8), out.shape

    ref = jax.block_until_ready(reference_forward(params, x))
    # bf16 MXU operands (f32 accumulation) per the perf guidance -> slightly
    # looser tolerance vs the pure-f32 reference.
    assert jnp.allclose(out, ref, rtol=5e-2, atol=5e-2), (
        float(jnp.max(jnp.abs(out - ref))))

    print("KERNEL_OK")
</pallas_src>

<mosaic_0001>
module attributes {stable_mosaic.version = 11 : i64} {
  func.func @_pool_conv3x3_kernel(%arg0: i32, %arg1: memref<1x16x8x8xf32, #tpu.memory_space<vmem>>, %arg2: memref<36x8xbf16, #tpu.memory_space<vmem>>, %arg3: memref<1x8xf32, #tpu.memory_space<vmem>>, %arg4: memref<1x64x8xf32, #tpu.memory_space<vmem>>, %arg5: memref<1x1x8xf32, #tpu.memory_space<vmem>>, %arg6: memref<1x1x8xf32, #tpu.memory_space<vmem>>, %arg7: memref<10x10x4xf32, #tpu.memory_space<vmem>>) attributes {dimension_semantics = [#tpu.dimension_semantics<parallel>], iteration_bounds = array<i64: 2>, scalar_prefetch = 0 : i64, scratch_operands = 1 : i64, tpu.core_type = #tpu.core_type<tc>, window_params = [{transform_indices = @transform_0, window_bounds = array<i64: 1, 16, 8, 8>}, {pipeline_mode = #tpu.pipeline_mode<synchronous>, transform_indices = @transform_1, window_bounds = array<i64: 36, 8>}, {pipeline_mode = #tpu.pipeline_mode<synchronous>, transform_indices = @transform_2, window_bounds = array<i64: 1, 8>}, {transform_indices = @transform_3, window_bounds = array<i64: 1, 64, 8>}, {transform_indices = @transform_4, window_bounds = array<i64: 1, 1, 8>}, {transform_indices = @transform_5, window_bounds = array<i64: 1, 1, 8>}]} {
    %c0 = arith.constant 0 : index
    %c0_0 = arith.constant 0 : index
    %c0_1 = arith.constant 0 : index
    %c0_2 = arith.constant 0 : index
    %0 = vector.load %arg1[%c0, %c0_0, %c0_1, %c0_2] : memref<1x16x8x8xf32, #tpu.memory_space<vmem>>, vector<1x16x8x8xf32>
    %1 = vector.shape_cast %0 : vector<1x16x8x8xf32> to vector<16x8x8xf32>
    %2 = vector.extract_strided_slice %1 {offsets = [0, 0, 0], sizes = [16, 8, 4], strides = [1, 1, 1]} : vector<16x8x8xf32> to vector<16x8x4xf32>
    %3 = vector.extract_strided_slice %1 {offsets = [0, 0, 4], sizes = [16, 8, 4], strides = [1, 1, 1]} : vector<16x8x8xf32> to vector<16x8x4xf32>
    %4 = arith.maximumf %2, %3 : vector<16x8x4xf32>
    %5 = vector.shape_cast %4 : vector<16x8x4xf32> to vector<8x2x8x4xf32>
    %6 = vector.extract_strided_slice %5 {offsets = [0, 0, 0, 0], sizes = [8, 1, 8, 4], strides = [1, 1, 1, 1]} : vector<8x2x8x4xf32> to vector<8x1x8x4xf32>
    %7 = vector.shape_cast %6 : vector<8x1x8x4xf32> to vector<8x8x4xf32>
    %8 = vector.extract_strided_slice %5 {offsets = [0, 1, 0, 0], sizes = [8, 1, 8, 4], strides = [1, 1, 1, 1]} : vector<8x2x8x4xf32> to vector<8x1x8x4xf32>
    %9 = vector.shape_cast %8 : vector<8x1x8x4xf32> to vector<8x8x4xf32>
    %10 = arith.maximumf %7, %9 : vector<8x8x4xf32>
    %cst = arith.constant 0.000000e+00 : f32
    %11 = vector.broadcast %cst : f32 to vector<10x10x4xf32>
    %c0_3 = arith.constant 0 : index
    %c0_4 = arith.constant 0 : index
    %c0_5 = arith.constant 0 : index
    %12 = vector.load %arg7[%c0_3, %c0_4, %c0_5] : memref<10x10x4xf32, #tpu.memory_space<vmem>>, vector<10x10x4xf32>
    tpu.vector_store %arg7[%c0_3, %c0_4, %c0_5], %11 {strides = array<i32>} : memref<10x10x4xf32, #tpu.memory_space<vmem>>, vector<10x10x4xf32>,
    %c1 = arith.constant 1 : index
    %c1_6 = arith.constant 1 : index
    %c0_7 = arith.constant 0 : index
    %13 = vector.load %arg7[%c1, %c1_6, %c0_7] : memref<10x10x4xf32, #tpu.memory_space<vmem>>, vector<8x8x4xf32>
    tpu.vector_store %arg7[%c1, %c1_6, %c0_7], %10 {strides = array<i32>} : memref<10x10x4xf32, #tpu.memory_space<vmem>>, vector<8x8x4xf32>,
    %c0_8 = arith.constant 0 : index
    %c0_9 = arith.constant 0 : index
    %c0_10 = arith.constant 0 : index
    %14 = vector.load %arg7[%c0_8, %c0_9, %c0_10] : memref<10x10x4xf32, #tpu.memory_space<vmem>>, vector<8x8x4xf32>
    %c0_11 = arith.constant 0 : index
    %c1_12 = arith.constant 1 : index
    %c0_13 = arith.constant 0 : index
    %15 = vector.load %arg7[%c0_11, %c1_12, %c0_13] : memref<10x10x4xf32, #tpu.memory_space<vmem>>, vector<8x8x4xf32>
    %c0_14 = arith.constant 0 : index
    %c2 = arith.constant 2 : index
    %c0_15 = arith.constant 0 : index
    %16 = vector.load %arg7[%c0_14, %c2, %c0_15] : memref<10x10x4xf32, #tpu.memory_space<vmem>>, vector<8x8x4xf32>
    %c1_16 = arith.constant 1 : index
    %c0_17 = arith.constant 0 : index
    %c0_18 = arith.constant 0 : index
    %17 = vector.load %arg7[%c1_16, %c0_17, %c0_18] : memref<10x10x4xf32, #tpu.memory_space<vmem>>, vector<8x8x4xf32>
    %c1_19 = arith.constant 1 : index
    %c1_20 = arith.constant 1 : index
    %c0_21 = arith.constant 0 : index
    %18 = vector.load %arg7[%c1_19, %c1_20, %c0_21] : memref<10x10x4xf32, #tpu.memory_space<vmem>>, vector<8x8x4xf32>
    %c1_22 = arith.constant 1 : index
    %c2_23 = arith.constant 2 : index
    %c0_24 = arith.constant 0 : index
    %19 = vector.load %arg7[%c1_22, %c2_23, %c0_24] : memref<10x10x4xf32, #tpu.memory_space<vmem>>, vector<8x8x4xf32>
    %c2_25 = arith.constant 2 : index
    %c0_26 = arith.constant 0 : index
    %c0_27 = arith.constant 0 : index
    %20 = vector.load %arg7[%c2_25, %c0_26, %c0_27] : memref<10x10x4xf32, #tpu.memory_space<vmem>>, vector<8x8x4xf32>
    %c2_28 = arith.constant 2 : index
    %c1_29 = arith.constant 1 : index
    %c0_30 = arith.constant 0 : index
    %21 = vector.load %arg7[%c2_28, %c1_29, %c0_30] : memref<10x10x4xf32, #tpu.memory_space<vmem>>, vector<8x8x4xf32>
    %c2_31 = arith.constant 2 : index
    %c2_32 = arith.constant 2 : index
    %c0_33 = arith.constant 0 : index
    %22 = vector.load %arg7[%c2_31, %c2_32, %c0_33] : memref<10x10x4xf32, #tpu.memory_space<vmem>>, vector<8x8x4xf32>
    %23 = tpu.concatenate %14, %15, %16, %17, %18, %19, %20, %21, %22 in 2 : vector<8x8x4xf32>, vector<8x8x4xf32>, vector<8x8x4xf32>, vector<8x8x4xf32>, vector<8x8x4xf32>, vector<8x8x4xf32>, vector<8x8x4xf32>, vector<8x8x4xf32>, vector<8x8x4xf32> -> vector<8x8x36xf32>
    %24 = vector.shape_cast %23 : vector<8x8x36xf32> to vector<64x36xf32>
    %25 = arith.truncf %24 : vector<64x36xf32> to vector<64x36xbf16>
    %c0_34 = arith.constant 0 : index
    %c0_35 = arith.constant 0 : index
    %26 = vector.load %arg2[%c0_34, %c0_35] : memref<36x8xbf16, #tpu.memory_space<vmem>>, vector<36x8xbf16>
    %cst_36 = arith.constant dense<0.000000e+00> : vector<64x8xf32>
    %27 = tpu.matmul %25, %26, %cst_36 {dimension_numbers = #tpu.dot_dimension_numbers<[1], [0], [0], [1], [0, 0, 1, 1], [], []>} : vector<64x36xbf16>, vector<36x8xbf16>, vector<64x8xf32> -> vector<64x8xf32>
    %c0_37 = arith.constant 0 : index
    %c0_38 = arith.constant 0 : index
    %28 = vector.load %arg3[%c0_37, %c0_38] : memref<1x8xf32, #tpu.memory_space<vmem>>, vector<1x8xf32>
    %29 = vector.broadcast %28 : vector<1x8xf32> to vector<64x8xf32>
    %30 = arith.addf %27, %29 : vector<64x8xf32>
    %c0_39 = arith.constant 0 : index
    %c0_40 = arith.constant 0 : index
    %c0_41 = arith.constant 0 : index
    %31 = vector.load %arg4[%c0_39, %c0_40, %c0_41] : memref<1x64x8xf32, #tpu.memory_space<vmem>>, vector<1x64x8xf32>
    %32 = vector.shape_cast %31 : vector<1x64x8xf32> to vector<64x8xf32>
    %33 = vector.shape_cast %30 : vector<64x8xf32> to vector<1x64x8xf32>
    tpu.vector_store %arg4[%c0_39, %c0_40, %c0_41], %33 {strides = array<i32>} : memref<1x64x8xf32, #tpu.memory_space<vmem>>, vector<1x64x8xf32>,
    %cst_42 = arith.constant dense<0.000000e+00> : vector<8xf32>
    %34 = vector.multi_reduction <add>, %30, %cst_42 [0] : vector<64x8xf32> to vector<8xf32>
    %35 = vector.shape_cast %34 : vector<8xf32> to vector<1x8xf32>
    %c0_43 = arith.constant 0 : index
    %c0_44 = arith.constant 0 : index
    %c0_45 = arith.constant 0 : index
    %36 = vector.load %arg5[%c0_43, %c0_44, %c0_45] : memref<1x1x8xf32, #tpu.memory_space<vmem>>, vector<1x1x8xf32>
    %37 = vector.shape_cast %36 : vector<1x1x8xf32> to vector<1x8xf32>
    %38 = vector.shape_cast %35 : vector<1x8xf32> to vector<1x1x8xf32>
    tpu.vector_store %arg5[%c0_43, %c0_44, %c0_45], %38 {strides = array<i32>} : memref<1x1x8xf32, #tpu.memory_space<vmem>>, vector<1x1x8xf32>,
    %39 = arith.mulf %30, %30 : vector<64x8xf32>
    %cst_46 = arith.constant dense<0.000000e+00> : vector<8xf32>
    %40 = vector.multi_reduction <add>, %39, %cst_46 [0] : vector<64x8xf32> to vector<8xf32>
    %41 = vector.shape_cast %40 : vector<8xf32> to vector<1x8xf32>
    %c0_47 = arith.constant 0 : index
    %c0_48 = arith.constant 0 : index
    %c0_49 = arith.constant 0 : index
    %42 = vector.load %arg6[%c0_47, %c0_48, %c0_49] : memref<1x1x8xf32, #tpu.memory_space<vmem>>, vector<1x1x8xf32>
    %43 = vector.shape_cast %42 : vector<1x1x8xf32> to vector<1x8xf32>
    %44 = vector.shape_cast %41 : vector<1x8xf32> to vector<1x1x8xf32>
    tpu.vector_store %arg6[%c0_47, %c0_48, %c0_49], %44 {strides = array<i32>} : memref<1x1x8xf32, #tpu.memory_space<vmem>>, vector<1x1x8xf32>,
    return
  }
  func.func @transform_0(%arg0: i32) -> (i32, i32, i32, i32) {
    %c0_i32 = arith.constant 0 : i32
    %c0_i32_0 = arith.constant 0 : i32
    %c0_i32_1 = arith.constant 0 : i32
    %c0_i32_2 = arith.constant 0 : i32
    return %arg0, %c0_i32, %c0_i32_0, %c0_i32_1 : i32, i32, i32, i32
  }
  func.func @transform_1(%arg0: i32) -> (i32, i32) {
    %c0_i32 = arith.constant 0 : i32
    %c0_i32_0 = arith.constant 0 : i32
    %c0_i32_1 = arith.constant 0 : i32
    return %c0_i32, %c0_i32_0 : i32, i32
  }
  func.func @transform_2(%arg0: i32) -> (i32, i32) {
    %c0_i32 = arith.constant 0 : i32
    %c0_i32_0 = arith.constant 0 : i32
    %c0_i32_1 = arith.constant 0 : i32
    return %c0_i32, %c0_i32_0 : i32, i32
  }
  func.func @transform_3(%arg0: i32) -> (i32, i32, i32) {
    %c0_i32 = arith.constant 0 : i32
    %c0_i32_0 = arith.constant 0 : i32
    %c0_i32_1 = arith.constant 0 : i32
    return %arg0, %c0_i32, %c0_i32_0 : i32, i32, i32
  }
  func.func @transform_4(%arg0: i32) -> (i32, i32, i32) {
    %c0_i32 = arith.constant 0 : i32
    %c0_i32_0 = arith.constant 0 : i32
    %c0_i32_1 = arith.constant 0 : i32
    return %arg0, %c0_i32, %c0_i32_0 : i32, i32, i32
  }
  func.func @transform_5(%arg0: i32) -> (i32, i32, i32) {
    %c0_i32 = arith.constant 0 : i32
    %c0_i32_0 = arith.constant 0 : i32
    %c0_i32_1 = arith.constant 0 : i32
    return %arg0, %c0_i32, %c0_i32_0 : i32, i32, i32
  }
}

module attributes {stable_mosaic.version = 11 : i64} {
  func.func @_bnrelu_kernel(%arg0: i32, %arg1: memref<1x64x8xf32, #tpu.memory_space<vmem>>, %arg2: memref<1x8xf32, #tpu.memory_space<vmem>>, %arg3: memref<1x8xf32, #tpu.memory_space<vmem>>, %arg4: memref<1x64x8xf32, #tpu.memory_space<vmem>>) attributes {dimension_semantics = [#tpu.dimension_semantics<parallel>], iteration_bounds = array<i64: 2>, scalar_prefetch = 0 : i64, scratch_operands = 0 : i64, tpu.core_type = #tpu.core_type<tc>, window_params = [{transform_indices = @transform_0, window_bounds = array<i64: 1, 64, 8>}, {pipeline_mode = #tpu.pipeline_mode<synchronous>, transform_indices = @transform_1, window_bounds = array<i64: 1, 8>}, {pipeline_mode = #tpu.pipeline_mode<synchronous>, transform_indices = @transform_2, window_bounds = array<i64: 1, 8>}, {transform_indices = @transform_3, window_bounds = array<i64: 1, 64, 8>}]} {
    %c0 = arith.constant 0 : index
    %c0_0 = arith.constant 0 : index
    %c0_1 = arith.constant 0 : index
    %0 = vector.load %arg1[%c0, %c0_0, %c0_1] : memref<1x64x8xf32, #tpu.memory_space<vmem>>, vector<1x64x8xf32>
    %1 = vector.shape_cast %0 : vector<1x64x8xf32> to vector<64x8xf32>
    %c0_2 = arith.constant 0 : index
    %c0_3 = arith.constant 0 : index
    %2 = vector.load %arg2[%c0_2, %c0_3] : memref<1x8xf32, #tpu.memory_space<vmem>>, vector<1x8xf32>
    %3 = vector.broadcast %2 : vector<1x8xf32> to vector<64x8xf32>
    %4 = arith.mulf %1, %3 : vector<64x8xf32>
    %c0_4 = arith.constant 0 : index
    %c0_5 = arith.constant 0 : index
    %5 = vector.load %arg3[%c0_4, %c0_5] : memref<1x8xf32, #tpu.memory_space<vmem>>, vector<1x8xf32>
    %6 = vector.broadcast %5 : vector<1x8xf32> to vector<64x8xf32>
    %7 = arith.addf %4, %6 : vector<64x8xf32>
    %cst = arith.constant 0.000000e+00 : f32
    %8 = vector.broadcast %cst : f32 to vector<64x8xf32>
    %9 = arith.maximumf %7, %8 : vector<64x8xf32>
    %c0_6 = arith.constant 0 : index
    %c0_7 = arith.constant 0 : index
    %c0_8 = arith.constant 0 : index
    %10 = vector.load %arg4[%c0_6, %c0_7, %c0_8] : memref<1x64x8xf32, #tpu.memory_space<vmem>>, vector<1x64x8xf32>
    %11 = vector.shape_cast %10 : vector<1x64x8xf32> to vector<64x8xf32>
    %12 = vector.shape_cast %9 : vector<64x8xf32> to vector<1x64x8xf32>
    tpu.vector_store %arg4[%c0_6, %c0_7, %c0_8], %12 {strides = array<i32>} : memref<1x64x8xf32, #tpu.memory_space<vmem>>, vector<1x64x8xf32>,
    return
  }
  func.func @transform_0(%arg0: i32) -> (i32, i32, i32) {
    %c0_i32 = arith.constant 0 : i32
    %c0_i32_0 = arith.constant 0 : i32
    %c0_i32_1 = arith.constant 0 : i32
    return %arg0, %c0_i32, %c0_i32_0 : i32, i32, i32
  }
  func.func @transform_1(%arg0: i32) -> (i32, i32) {
    %c0_i32 = arith.constant 0 : i32
    %c0_i32_0 = arith.constant 0 : i32
    %c0_i32_1 = arith.constant 0 : i32
    return %c0_i32, %c0_i32_0 : i32, i32
  }
  func.func @transform_2(%arg0: i32) -> (i32, i32) {
    %c0_i32 = arith.constant 0 : i32
    %c0_i32_0 = arith.constant 0 : i32
    %c0_i32_1 = arith.constant 0 : i32
    return %c0_i32, %c0_i32_0 : i32, i32
  }
  func.func @transform_3(%arg0: i32) -> (i32, i32, i32) {
    %c0_i32 = arith.constant 0 : i32
    %c0_i32_0 = arith.constant 0 : i32
    %c0_i32_1 = arith.constant 0 : i32
    return %arg0, %c0_i32, %c0_i32_0 : i32, i32, i32
  }
}

module attributes {stable_mosaic.version = 11 : i64} {
  func.func @_bnrelu_conv3x3_kernel(%arg0: i32, %arg1: memref<1x64x8xf32, #tpu.memory_space<vmem>>, %arg2: memref<1x8xf32, #tpu.memory_space<vmem>>, %arg3: memref<1x8xf32, #tpu.memory_space<vmem>>, %arg4: memref<72x8xbf16, #tpu.memory_space<vmem>>, %arg5: memref<1x8xf32, #tpu.memory_space<vmem>>, %arg6: memref<1x64x8xf32, #tpu.memory_space<vmem>>, %arg7: memref<1x1x8xf32, #tpu.memory_space<vmem>>, %arg8: memref<1x1x8xf32, #tpu.memory_space<vmem>>, %arg9: memref<10x10x8xf32, #tpu.memory_space<vmem>>) attributes {dimension_semantics = [#tpu.dimension_semantics<parallel>], iteration_bounds = array<i64: 2>, scalar_prefetch = 0 : i64, scratch_operands = 1 : i64, tpu.core_type = #tpu.core_type<tc>, window_params = [{transform_indices = @transform_0, window_bounds = array<i64: 1, 64, 8>}, {pipeline_mode = #tpu.pipeline_mode<synchronous>, transform_indices = @transform_1, window_bounds = array<i64: 1, 8>}, {pipeline_mode = #tpu.pipeline_mode<synchronous>, transform_indices = @transform_2, window_bounds = array<i64: 1, 8>}, {pipeline_mode = #tpu.pipeline_mode<synchronous>, transform_indices = @transform_3, window_bounds = array<i64: 72, 8>}, {pipeline_mode = #tpu.pipeline_mode<synchronous>, transform_indices = @transform_4, window_bounds = array<i64: 1, 8>}, {transform_indices = @transform_5, window_bounds = array<i64: 1, 64, 8>}, {transform_indices = @transform_6, window_bounds = array<i64: 1, 1, 8>}, {transform_indices = @transform_7, window_bounds = array<i64: 1, 1, 8>}]} {
    %c0 = arith.constant 0 : index
    %c0_0 = arith.constant 0 : index
    %c0_1 = arith.constant 0 : index
    %0 = vector.load %arg1[%c0, %c0_0, %c0_1] : memref<1x64x8xf32, #tpu.memory_space<vmem>>, vector<1x64x8xf32>
    %1 = vector.shape_cast %0 : vector<1x64x8xf32> to vector<64x8xf32>
    %c0_2 = arith.constant 0 : index
    %c0_3 = arith.constant 0 : index
    %2 = vector.load %arg2[%c0_2, %c0_3] : memref<1x8xf32, #tpu.memory_space<vmem>>, vector<1x8xf32>
    %3 = vector.broadcast %2 : vector<1x8xf32> to vector<64x8xf32>
    %4 = arith.mulf %1, %3 : vector<64x8xf32>
    %c0_4 = arith.constant 0 : index
    %c0_5 = arith.constant 0 : index
    %5 = vector.load %arg3[%c0_4, %c0_5] : memref<1x8xf32, #tpu.memory_space<vmem>>, vector<1x8xf32>
    %6 = vector.broadcast %5 : vector<1x8xf32> to vector<64x8xf32>
    %7 = arith.addf %4, %6 : vector<64x8xf32>
    %cst = arith.constant 0.000000e+00 : f32
    %8 = vector.broadcast %cst : f32 to vector<64x8xf32>
    %9 = arith.maximumf %7, %8 : vector<64x8xf32>
    %cst_6 = arith.constant 0.000000e+00 : f32
    %10 = vector.broadcast %cst_6 : f32 to vector<10x10x8xf32>
    %c0_7 = arith.constant 0 : index
    %c0_8 = arith.constant 0 : index
    %c0_9 = arith.constant 0 : index
    %11 = vector.load %arg9[%c0_7, %c0_8, %c0_9] : memref<10x10x8xf32, #tpu.memory_space<vmem>>, vector<10x10x8xf32>
    tpu.vector_store %arg9[%c0_7, %c0_8, %c0_9], %10 {strides = array<i32>} : memref<10x10x8xf32, #tpu.memory_space<vmem>>, vector<10x10x8xf32>,
    %12 = vector.shape_cast %9 : vector<64x8xf32> to vector<8x8x8xf32>
    %c1 = arith.constant 1 : index
    %c1_10 = arith.constant 1 : index
    %c0_11 = arith.constant 0 : index
    %13 = vector.load %arg9[%c1, %c1_10, %c0_11] : memref<10x10x8xf32, #tpu.memory_space<vmem>>, vector<8x8x8xf32>
    tpu.vector_store %arg9[%c1, %c1_10, %c0_11], %12 {strides = array<i32>} : memref<10x10x8xf32, #tpu.memory_space<vmem>>, vector<8x8x8xf32>,
    %c0_12 = arith.constant 0 : index
    %c0_13 = arith.constant 0 : index
    %c0_14 = arith.constant 0 : index
    %14 = vector.load %arg9[%c0_12, %c0_13, %c0_14] : memref<10x10x8xf32, #tpu.memory_space<vmem>>, vector<8x8x8xf32>
    %c0_15 = arith.constant 0 : index
    %c1_16 = arith.constant 1 : index
    %c0_17 = arith.constant 0 : index
    %15 = vector.load %arg9[%c0_15, %c1_16, %c0_17] : memref<10x10x8xf32, #tpu.memory_space<vmem>>, vector<8x8x8xf32>
    %c0_18 = arith.constant 0 : index
    %c2 = arith.constant 2 : index
    %c0_19 = arith.constant 0 : index
    %16 = vector.load %arg9[%c0_18, %c2, %c0_19] : memref<10x10x8xf32, #tpu.memory_space<vmem>>, vector<8x8x8xf32>
    %c1_20 = arith.constant 1 : index
    %c0_21 = arith.constant 0 : index
    %c0_22 = arith.constant 0 : index
    %17 = vector.load %arg9[%c1_20, %c0_21, %c0_22] : memref<10x10x8xf32, #tpu.memory_space<vmem>>, vector<8x8x8xf32>
    %c1_23 = arith.constant 1 : index
    %c1_24 = arith.constant 1 : index
    %c0_25 = arith.constant 0 : index
    %18 = vector.load %arg9[%c1_23, %c1_24, %c0_25] : memref<10x10x8xf32, #tpu.memory_space<vmem>>, vector<8x8x8xf32>
    %c1_26 = arith.constant 1 : index
    %c2_27 = arith.constant 2 : index
    %c0_28 = arith.constant 0 : index
    %19 = vector.load %arg9[%c1_26, %c2_27, %c0_28] : memref<10x10x8xf32, #tpu.memory_space<vmem>>, vector<8x8x8xf32>
    %c2_29 = arith.constant 2 : index
    %c0_30 = arith.constant 0 : index
    %c0_31 = arith.constant 0 : index
    %20 = vector.load %arg9[%c2_29, %c0_30, %c0_31] : memref<10x10x8xf32, #tpu.memory_space<vmem>>, vector<8x8x8xf32>
    %c2_32 = arith.constant 2 : index
    %c1_33 = arith.constant 1 : index
    %c0_34 = arith.constant 0 : index
    %21 = vector.load %arg9[%c2_32, %c1_33, %c0_34] : memref<10x10x8xf32, #tpu.memory_space<vmem>>, vector<8x8x8xf32>
    %c2_35 = arith.constant 2 : index
    %c2_36 = arith.constant 2 : index
    %c0_37 = arith.constant 0 : index
    %22 = vector.load %arg9[%c2_35, %c2_36, %c0_37] : memref<10x10x8xf32, #tpu.memory_space<vmem>>, vector<8x8x8xf32>
    %23 = tpu.concatenate %14, %15, %16, %17, %18, %19, %20, %21, %22 in 2 : vector<8x8x8xf32>, vector<8x8x8xf32>, vector<8x8x8xf32>, vector<8x8x8xf32>, vector<8x8x8xf32>, vector<8x8x8xf32>, vector<8x8x8xf32>, vector<8x8x8xf32>, vector<8x8x8xf32> -> vector<8x8x72xf32>
    %24 = vector.shape_cast %23 : vector<8x8x72xf32> to vector<64x72xf32>
    %25 = arith.truncf %24 : vector<64x72xf32> to vector<64x72xbf16>
    %c0_38 = arith.constant 0 : index
    %c0_39 = arith.constant 0 : index
    %26 = vector.load %arg4[%c0_38, %c0_39] : memref<72x8xbf16, #tpu.memory_space<vmem>>, vector<72x8xbf16>
    %cst_40 = arith.constant dense<0.000000e+00> : vector<64x8xf32>
    %27 = tpu.matmul %25, %26, %cst_40 {dimension_numbers = #tpu.dot_dimension_numbers<[1], [0], [0], [1], [0, 0, 1, 1], [], []>} : vector<64x72xbf16>, vector<72x8xbf16>, vector<64x8xf32> -> vector<64x8xf32>
    %c0_41 = arith.constant 0 : index
    %c0_42 = arith.constant 0 : index
    %28 = vector.load %arg5[%c0_41, %c0_42] : memref<1x8xf32, #tpu.memory_space<vmem>>, vector<1x8xf32>
    %29 = vector.broadcast %28 : vector<1x8xf32> to vector<64x8xf32>
    %30 = arith.addf %27, %29 : vector<64x8xf32>
    %c0_43 = arith.constant 0 : index
    %c0_44 = arith.constant 0 : index
    %c0_45 = arith.constant 0 : index
    %31 = vector.load %arg6[%c0_43, %c0_44, %c0_45] : memref<1x64x8xf32, #tpu.memory_space<vmem>>, vector<1x64x8xf32>
    %32 = vector.shape_cast %31 : vector<1x64x8xf32> to vector<64x8xf32>
    %33 = vector.shape_cast %30 : vector<64x8xf32> to vector<1x64x8xf32>
    tpu.vector_store %arg6[%c0_43, %c0_44, %c0_45], %33 {strides = array<i32>} : memref<1x64x8xf32, #tpu.memory_space<vmem>>, vector<1x64x8xf32>,
    %cst_46 = arith.constant dense<0.000000e+00> : vector<8xf32>
    %34 = vector.multi_reduction <add>, %30, %cst_46 [0] : vector<64x8xf32> to vector<8xf32>
    %35 = vector.shape_cast %34 : vector<8xf32> to vector<1x8xf32>
    %c0_47 = arith.constant 0 : index
    %c0_48 = arith.constant 0 : index
    %c0_49 = arith.constant 0 : index
    %36 = vector.load %arg7[%c0_47, %c0_48, %c0_49] : memref<1x1x8xf32, #tpu.memory_space<vmem>>, vector<1x1x8xf32>
    %37 = vector.shape_cast %36 : vector<1x1x8xf32> to vector<1x8xf32>
    %38 = vector.shape_cast %35 : vector<1x8xf32> to vector<1x1x8xf32>
    tpu.vector_store %arg7[%c0_47, %c0_48, %c0_49], %38 {strides = array<i32>} : memref<1x1x8xf32, #tpu.memory_space<vmem>>, vector<1x1x8xf32>,
    %39 = arith.mulf %30, %30 : vector<64x8xf32>
    %cst_50 = arith.constant dense<0.000000e+00> : vector<8xf32>
    %40 = vector.multi_reduction <add>, %39, %cst_50 [0] : vector<64x8xf32> to vector<8xf32>
    %41 = vector.shape_cast %40 : vector<8xf32> to vector<1x8xf32>
    %c0_51 = arith.constant 0 : index
    %c0_52 = arith.constant 0 : index
    %c0_53 = arith.constant 0 : index
    %42 = vector.load %arg8[%c0_51, %c0_52, %c0_53] : memref<1x1x8xf32, #tpu.memory_space<vmem>>, vector<1x1x8xf32>
    %43 = vector.shape_cast %42 : vector<1x1x8xf32> to vector<1x8xf32>
    %44 = vector.shape_cast %41 : vector<1x8xf32> to vector<1x1x8xf32>
    tpu.vector_store %arg8[%c0_51, %c0_52, %c0_53], %44 {strides = array<i32>} : memref<1x1x8xf32, #tpu.memory_space<vmem>>, vector<1x1x8xf32>,
    return
  }
  func.func @transform_0(%arg0: i32) -> (i32, i32, i32) {
    %c0_i32 = arith.constant 0 : i32
    %c0_i32_0 = arith.constant 0 : i32
    %c0_i32_1 = arith.constant 0 : i32
    return %arg0, %c0_i32, %c0_i32_0 : i32, i32, i32
  }
  func.func @transform_1(%arg0: i32) -> (i32, i32) {
    %c0_i32 = arith.constant 0 : i32
    %c0_i32_0 = arith.constant 0 : i32
    %c0_i32_1 = arith.constant 0 : i32
    return %c0_i32, %c0_i32_0 : i32, i32
  }
  func.func @transform_2(%arg0: i32) -> (i32, i32) {
    %c0_i32 = arith.constant 0 : i32
    %c0_i32_0 = arith.constant 0 : i32
    %c0_i32_1 = arith.constant 0 : i32
    return %c0_i32, %c0_i32_0 : i32, i32
  }
  func.func @transform_3(%arg0: i32) -> (i32, i32) {
    %c0_i32 = arith.constant 0 : i32
    %c0_i32_0 = arith.constant 0 : i32
    %c0_i32_1 = arith.constant 0 : i32
    return %c0_i32, %c0_i32_0 : i32, i32
  }
  func.func @transform_4(%arg0: i32) -> (i32, i32) {
    %c0_i32 = arith.constant 0 : i32
    %c0_i32_0 = arith.constant 0 : i32
    %c0_i32_1 = arith.constant 0 : i32
    return %c0_i32, %c0_i32_0 : i32, i32
  }
  func.func @transform_5(%arg0: i32) -> (i32, i32, i32) {
    %c0_i32 = arith.constant 0 : i32
    %c0_i32_0 = arith.constant 0 : i32
    %c0_i32_1 = arith.constant 0 : i32
    return %arg0, %c0_i32, %c0_i32_0 : i32, i32, i32
  }
  func.func @transform_6(%arg0: i32) -> (i32, i32, i32) {
    %c0_i32 = arith.constant 0 : i32
    %c0_i32_0 = arith.constant 0 : i32
    %c0_i32_1 = arith.constant 0 : i32
    return %arg0, %c0_i32, %c0_i32_0 : i32, i32, i32
  }
  func.func @transform_7(%arg0: i32) -> (i32, i32, i32) {
    %c0_i32 = arith.constant 0 : i32
    %c0_i32_0 = arith.constant 0 : i32
    %c0_i32_1 = arith.constant 0 : i32
    return %arg0, %c0_i32, %c0_i32_0 : i32, i32, i32
  }
}

</mosaic_0001>

<llo_original>
// kernel: downsample_forward.5
$region0: #{downsample_forward.5}
  #allocation0 [shape = 'u32[]', space=smem, size = 0x4, offset = 0x4, fixed_abs, tag = 'smem constant byte address 0x4 - core index']
  #allocation1 [shape = 'u32[144,128]{1,0:T(1,128)}', space=vmem, size = 0x12000, scoped, tag = 'internal scratch']
  %s0 = inlined_call_operand.vmem [shape: f32[2,64,8], index: 0, kind: input, shape index: {}]
  %s1 = inlined_call_operand.vmem [shape: f32[1,8], index: 1, kind: input, shape index: {}]
  %s2 = inlined_call_operand.vmem [shape: f32[1,8], index: 2, kind: input, shape index: {}]
  %s3 = inlined_call_operand.vmem [shape: f32[2,64,8], index: 3, kind: output, shape index: {}]
  %s4 = sld [smem:[#allocation0]]
  $region45: #{downsample_forward.5} parent=0
    _
  %s6 = ssub.s32 1, %s4
  %s7 = scalar_select 0, %s6, %s4
  loop: start=0, step=1, limit=4
  $region2: #{downsample_forward.5} parent=0 // loop_pre_header
    _
  $region3: #{downsample_forward.5} parent=0 // loop_header
    %s9 = sphi 0, %s13
    %p10 = scmp.ge.s32.totalorder %s9, 4
    %s19 = sphi 0, %s21
    %s22 = sphi 0, %s19
    %s23 = sphi 0, %s22
    %s39 = sphi 0, %s23
    %s43 = sphi 0, %s43
    %s45 = sphi 0, %s43
    %s46 = sphi 0, %s45
    %s60 = sphi 0, %s46
    %s64 = sphi 0, %s64
    %s66 = sphi 0, %s64
    %s67 = sphi 0, %s66
    %s81 = sphi 0, %s67
    %s87 = sphi 0, %s89
    %s90 = sphi 0, %s87
    %s91 = sphi 0, %s90
    %s107 = sphi 0, %s91
  $region4: #{downsample_forward.5} parent=0 // loop_header_branch
    %12 = sbr.rel (%p10) target = $region8
  $region5: #{downsample_forward.5} parent=0 // loop_body
    %s14 = ssub.s32 %s9, 1
    %s15 = ssub.s32 %s9, 2
    %s16 = sadd.s32 %s9, 1
    %s17 = ssub.s32 %s9, %s16
    %p18 = scmp.eq.s32.totalorder %s17, 0
    %s20 = sadd.s32 %s19, 1
    %s21 = scalar_select %p18, %s19, %s20
    %p24 = pneg %p18
    %p25 = scmp.eq.s32.totalorder %s9, 1
    %p26 = por %p24, %p25
    %p27 = scmp.ne.s32.totalorder %s19, %s22
    %p28 = scmp.eq.s32.totalorder %s9, 0
    %p29 = por %p27, %p28
    %p30 = scmp.ne.s32.totalorder %s19, %s22
    %p31 = scmp.eq.s32.totalorder %s14, 1
    %p32 = por %p30, %p31
    %p33 = scmp.ne.s32.totalorder %s22, %s23
    %p34 = scmp.eq.s32.totalorder %s14, 0
    %p35 = por %p33, %p34
    %p36 = scmp.ne.s32.totalorder %s22, %s23
    %p37 = scmp.eq.s32.totalorder %s15, 1
    %p38 = por %p36, %p37
    %p40 = scmp.ne.s32.totalorder %s23, %s39
    %p41 = scmp.eq.s32.totalorder %s15, 0
    %p42 = por %p40, %p41
    %s44 = sadd.s32 %s43, 1
    %p47 = scmp.eq.s32.totalorder %s9, 1
    %p48 = scmp.ne.s32.totalorder %s43, %s45
    %p49 = scmp.eq.s32.totalorder %s9, 0
    %p50 = por %p48, %p49
    %p51 = scmp.ne.s32.totalorder %s43, %s45
    %p52 = scmp.eq.s32.totalorder %s14, 1
    %p53 = por %p51, %p52
    %p54 = scmp.ne.s32.totalorder %s45, %s46
    %p55 = scmp.eq.s32.totalorder %s14, 0
    %p56 = por %p54, %p55
    %p57 = scmp.ne.s32.totalorder %s45, %s46
    %p58 = scmp.eq.s32.totalorder %s15, 1
    %p59 = por %p57, %p58
    %p61 = scmp.ne.s32.totalorder %s46, %s60
    %p62 = scmp.eq.s32.totalorder %s15, 0
    %p63 = por %p61, %p62
    %s65 = sadd.s32 %s64, 1
    %p68 = scmp.eq.s32.totalorder %s9, 1
    %p69 = scmp.ne.s32.totalorder %s64, %s66
    %p70 = scmp.eq.s32.totalorder %s9, 0
    %p71 = por %p69, %p70
    %p72 = scmp.ne.s32.totalorder %s64, %s66
    %p73 = scmp.eq.s32.totalorder %s14, 1
    %p74 = por %p72, %p73
    %p75 = scmp.ne.s32.totalorder %s66, %s67
    %p76 = scmp.eq.s32.totalorder %s14, 0
    %p77 = por %p75, %p76
    %p78 = scmp.ne.s32.totalorder %s66, %s67
    %p79 = scmp.eq.s32.totalorder %s15, 1
    %p80 = por %p78, %p79
    %p82 = scmp.ne.s32.totalorder %s67, %s81
    %p83 = scmp.eq.s32.totalorder %s15, 0
    %p84 = por %p82, %p83
    %s85 = ssub.s32 %s9, %s16
    %p86 = scmp.eq.s32.totalorder %s85, 0
    %s88 = sadd.s32 %s87, 1
    %s89 = scalar_select %p86, %s87, %s88
    %p92 = pneg %p86
    %p93 = scmp.eq.s32.totalorder %s9, 1
    %p94 = por %p92, %p93
    %p95 = scmp.ne.s32.totalorder %s87, %s90
    %p96 = scmp.eq.s32.totalorder %s9, 0
    %p97 = por %p95, %p96
    %p98 = scmp.ne.s32.totalorder %s87, %s90
    %p99 = scmp.eq.s32.totalorder %s14, 1
    %p100 = por %p98, %p99
    %p101 = scmp.ne.s32.totalorder %s90, %s91
    %p102 = scmp.eq.s32.totalorder %s14, 0
    %p103 = por %p101, %p102
    %p104 = scmp.ne.s32.totalorder %s90, %s91
    %p105 = scmp.eq.s32.totalorder %s15, 1
    %p106 = por %p104, %p105
    %p108 = scmp.ne.s32.totalorder %s91, %s107
    %p109 = scmp.eq.s32.totalorder %s15, 0
    %p110 = por %p108, %p109
    %p111 = scmp.le.s32.totalorder 1, %s9
    %p112 = scmp.lt.s32.totalorder %s9, 3
    %p113 = pnand %p111, %p112
    %p114 = pneg %p113
    // Predicated region
    $region9: #{downsample_forward.5} parent=5 // pred_check
      _
    $region10: #{downsample_forward.5} parent=5 // pred_check_branch
      %116 = sbr.rel (%p113) target = $region12
    $region11: #{downsample_forward.5} parent=5 // pred_region
      %s117 = ssub.s32 %s9, 1
      // Predicated region
      $region13: #{downsample_forward.5} parent=11 // pred_check
        %p118 = pneg %p56
      $region14: #{downsample_forward.5} parent=11 // pred_check_branch
        %120 = sbr.rel (%p118) target = $region16
      $region15: #{downsample_forward.5} parent=11 // pred_region
        _
      $region16: #{downsample_forward.5} parent=11 // pred_fallthru
        _
      // Predicated region
      $region17: #{downsample_forward.5} parent=11 // pred_check
        %p121 = pneg %p77
      $region18: #{downsample_forward.5} parent=11 // pred_check_branch
        %123 = sbr.rel (%p121) target = $region20
      $region19: #{downsample_forward.5} parent=11 // pred_region
        _
      $region20: #{downsample_forward.5} parent=11 // pred_fallthru
        _
    $region12: #{downsample_forward.5} parent=5 // pred_fallthru
      _
    %p124 = scmp.lt.s32.totalorder %s9, 2
    // Predicated region
    $region21: #{downsample_forward.5} parent=5 // pred_check
      %p125 = pneg %p124
    $region22: #{downsample_forward.5} parent=5 // pred_check_branch
      %127 = sbr.rel (%p125) target = $region24
    $region23: #{downsample_forward.5} parent=5 // pred_region
      // Predicated region
      $region25: #{downsample_forward.5} parent=23 // pred_check
        %p128 = pneg %p29
      $region26: #{downsample_forward.5} parent=23 // pred_check_branch
        %130 = sbr.rel (%p128) target = $region28
      $region27: #{downsample_forward.5} parent=23 // pred_region
        %p131 = scmp.lt.s32.totalorder %s9, 1
        %s132 = scalar_select %p131, %s9, 1
        %s133 = smul.addr %s132, 8
        %s134 = smul.addr %s133, 8
        %s135 = scalar_lea.vmem %s0, %s134
      $region28: #{downsample_forward.5} parent=23 // pred_fallthru
        _
    $region24: #{downsample_forward.5} parent=5 // pred_fallthru
      _
    %p136 = scmp.le.s32.totalorder 1, %s9
    %p137 = scmp.lt.s32.totalorder %s9, 3
    %p138 = pnand %p136, %p137
    %p139 = pneg %p138
    // Predicated region
    $region29: #{downsample_forward.5} parent=5 // pred_check
      _
    $region30: #{downsample_forward.5} parent=5 // pred_check_branch
      %141 = sbr.rel (%p138) target = $region32
    $region31: #{downsample_forward.5} parent=5 // pred_region
      %s142 = ssub.s32 %s9, 1
      %p143 = scmp.lt.s32.totalorder %s14, 1
      %s144 = scalar_select %p143, %s14, 1
      %s145 = smul.addr %s144, 8
      %s146 = smul.addr %s145, 8
      %s147 = scalar_lea.vmem %s0, %s146
      %p148 = pneg %p35
      %p149 = pneg %p32
      %p150 = pneg %p56
      %p151 = pneg %p53
      %p152 = pneg %p77
      %p153 = pneg %p74
      %p154 = pneg %p103
      %p155 = pneg %p100
      %p156 = scmp.lt.s32.totalorder %s14, 1
      %s157 = scalar_select %p156, %s14, 1
      %s158 = smul.addr %s157, 8
      %s159 = smul.addr %s158, 8
      %s160 = scalar_lea.vmem %s3, %s159
      %p161 = scmp.lt.s32.totalorder %s14, 1
      %s162 = scalar_select %p161, %s14, 1
      %s163 = smul.addr %s162, 8
      %s164 = smul.addr %s163, 8
      %s165 = scalar_lea.vmem %s0, %s164
      %p166 = scmp.lt.s32.totalorder %s14, 1
      %s167 = scalar_select %p166, %s14, 1
      %s168 = smul.addr %s167, 8
      %s169 = smul.addr %s168, 8
      %s170 = scalar_lea.vmem %s3, %s169
      %v171 = vld [vmem:[%s165] sm:$0xff]
      %v172 = vld [vmem:[%s165 + $0x8] sm:$0xff]
      %v173 = vld [vmem:[%s165 + $0x10] sm:$0xff]
      %v174 = vld [vmem:[%s165 + $0x18] sm:$0xff]
      %v175 = vld [vmem:[%s165 + $0x20] sm:$0xff]
      %v176 = vld [vmem:[%s165 + $0x28] sm:$0xff]
      %v177 = vld [vmem:[%s165 + $0x30] sm:$0xff]
      %v178 = vld [vmem:[%s165 + $0x38] sm:$0xff]
      %v179 = vld [vmem:[%s1] sm:$0x1]
      %v181 = vlaneseq
      %v182 = vshrl.u32 %v181, 7
      %v183 = vsub.s32 0, %v182
      %v184 = vrot.slane %v179, %v183
      %v186 = vmul.f32 %v171, %v184
      %v187 = vmul.f32 %v172, %v184
      %v188 = vmul.f32 %v173, %v184
      %v189 = vmul.f32 %v174, %v184
      %v190 = vmul.f32 %v175, %v184
      %v191 = vmul.f32 %v176, %v184
      %v192 = vmul.f32 %v177, %v184
      %v193 = vmul.f32 %v178, %v184
      %v194 = vld [vmem:[%s2] sm:$0x1]
      %v196 = vlaneseq
      %v197 = vshrl.u32 %v196, 7
      %v198 = vsub.s32 0, %v197
      %v199 = vrot.slane %v194, %v198
      %v201 = vadd.f32 %v186, %v199
      %v202 = vadd.f32 %v187, %v199
      %v203 = vadd.f32 %v188, %v199
      %v204 = vadd.f32 %v189, %v199
      %v205 = vadd.f32 %v190, %v199
      %v206 = vadd.f32 %v191, %v199
      %v207 = vadd.f32 %v192, %v199
      %v208 = vadd.f32 %v193, %v199
      %v209 = vmax.f32 %v201, 0.0
      %v210 = vmax.f32 %v202, 0.0
      %v211 = vmax.f32 %v203, 0.0
      %v212 = vmax.f32 %v204, 0.0
      %v213 = vmax.f32 %v205, 0.0
      %v214 = vmax.f32 %v206, 0.0
      %v215 = vmax.f32 %v207, 0.0
      %v216 = vmax.f32 %v208, 0.0
      %vm217 = vcmask 64512
      %218 = vst.msk [vmem:[%s170] sm:$0xff] %vm217, %v209
      %219 = vst.msk [vmem:[%s170 + $0x8] sm:$0xff] %vm217, %v210
      %220 = vst.msk [vmem:[%s170 + $0x10] sm:$0xff] %vm217, %v211
      %221 = vst.msk [vmem:[%s170 + $0x18] sm:$0xff] %vm217, %v212
      %222 = vst.msk [vmem:[%s170 + $0x20] sm:$0xff] %vm217, %v213
      %223 = vst.msk [vmem:[%s170 + $0x28] sm:$0xff] %vm217, %v214
      %224 = vst.msk [vmem:[%s170 + $0x30] sm:$0xff] %vm217, %v215
      %225 = vst.msk [vmem:[%s170 + $0x38] sm:$0xff] %vm217, %v216
      %p226 = scmp.lt.s32.totalorder %s14, 1
      %s227 = scalar_select %p226, %s14, 1
      %s228 = smul.addr %s227, 8
      %s229 = smul.addr %s228, 8
      %s230 = scalar_lea.vmem %s3, %s229
      // Predicated region
      $region33: #{downsample_forward.5} parent=31 // pred_check
        %p231 = pneg %p100
      $region34: #{downsample_forward.5} parent=31 // pred_check_branch
        %233 = sbr.rel (%p231) target = $region36
      $region35: #{downsample_forward.5} parent=31 // pred_region
        _
      $region36: #{downsample_forward.5} parent=31 // pred_fallthru
        _
    $region32: #{downsample_forward.5} parent=5 // pred_fallthru
      _
    %p234 = scmp.le.s32.totalorder 2, %s9
    // Predicated region
    $region37: #{downsample_forward.5} parent=5 // pred_check
      %p235 = pneg %p234
    $region38: #{downsample_forward.5} parent=5 // pred_check_branch
      %237 = sbr.rel (%p235) target = $region40
    $region39: #{downsample_forward.5} parent=5 // pred_region
      %s238 = ssub.s32 %s9, 2
      // Predicated region
      $region41: #{downsample_forward.5} parent=39 // pred_check
        %p239 = pneg %p106
      $region42: #{downsample_forward.5} parent=39 // pred_check_branch
        %241 = sbr.rel (%p239) target = $region44
      $region43: #{downsample_forward.5} parent=39 // pred_region
        %p242 = scmp.lt.s32.totalorder %s15, 1
        %s243 = scalar_select %p242, %s15, 1
        %s244 = smul.addr %s243, 8
        %s245 = smul.addr %s244, 8
        %s246 = scalar_lea.vmem %s3, %s245
      $region44: #{downsample_forward.5} parent=39 // pred_fallthru
        _
    $region40: #{downsample_forward.5} parent=5 // pred_fallthru
      _
  $region6: #{downsample_forward.5} parent=0 // loop_footer
    %s13 = sadd.s32 1, %s9
  $region7: #{downsample_forward.5} parent=0 // loop_footer_branch
    %8 = sbr.rel target = $region3
  $region8: #{downsample_forward.5} parent=0 // loop_exit
    _

// kernel: downsample_forward.3
$region0: #{downsample_forward.3}
  #allocation0 [shape = 'u32[]', space=smem, size = 0x4, offset = 0x4, fixed_abs, tag = 'smem constant byte address 0x4 - core index']
  #allocation1 [shape = 'u32[144,128]{1,0:T(1,128)}', space=vmem, size = 0x12000, scoped, tag = 'internal scratch']
  #allocation2 [shape = 'f32[10,10,4]{2,1,0:T(8,128)}', space=vmem, size = 0x14000, scoped, tag = 'scratch operand']
  %s0 = inlined_call_operand.vmem [shape: f32[2,16,8,8], index: 0, kind: input, shape index: {}]
  %s1 = inlined_call_operand.vmem [shape: bf16[36,8], index: 1, kind: input, shape index: {}]
  %s2 = inlined_call_operand.vmem [shape: f32[1,8], index: 2, kind: input, shape index: {}]
  %s3 = inlined_call_operand.vmem [shape: f32[2,64,8], index: 3, kind: output, shape index: {0}]
  %s4 = inlined_call_operand.vmem [shape: f32[2,1,8], index: 4, kind: output, shape index: {1}]
  %s5 = inlined_call_operand.vmem [shape: f32[2,1,8], index: 5, kind: output, shape index: {2}]
  %6 = xla_tuple %s3, %s4, %s5
  %s7 = sld [smem:[#allocation0]]
  $region61: #{downsample_forward.3} parent=0
    _
  %s9 = ssub.s32 1, %s7
  %s10 = scalar_select 0, %s9, %s7
  loop: start=0, step=1, limit=4
  $region2: #{downsample_forward.3} parent=0 // loop_pre_header
    _
  $region3: #{downsample_forward.3} parent=0 // loop_header
    %s12 = sphi 0, %s16
    %p13 = scmp.ge.s32.totalorder %s12, 4
    %s22 = sphi 0, %s24
    %s25 = sphi 0, %s22
    %s26 = sphi 0, %s25
    %s42 = sphi 0, %s26
    %s46 = sphi 0, %s46
    %s48 = sphi 0, %s46
    %s49 = sphi 0, %s48
    %s63 = sphi 0, %s49
    %s67 = sphi 0, %s67
    %s69 = sphi 0, %s67
    %s70 = sphi 0, %s69
    %s84 = sphi 0, %s70
    %s90 = sphi 0, %s92
    %s93 = sphi 0, %s90
    %s94 = sphi 0, %s93
    %s110 = sphi 0, %s94
    %s116 = sphi 0, %s118
    %s119 = sphi 0, %s116
    %s120 = sphi 0, %s119
    %s136 = sphi 0, %s120
    %s142 = sphi 0, %s144
    %s145 = sphi 0, %s142
    %s146 = sphi 0, %s145
    %s162 = sphi 0, %s146
  $region4: #{downsample_forward.3} parent=0 // loop_header_branch
    %15 = sbr.rel (%p13) target = $region8
  $region5: #{downsample_forward.3} parent=0 // loop_body
    %s17 = ssub.s32 %s12, 1
    %s18 = ssub.s32 %s12, 2
    %s19 = sadd.s32 %s12, 1
    %s20 = ssub.s32 %s12, %s19
    %p21 = scmp.eq.s32.totalorder %s20, 0
    %s23 = sadd.s32 %s22, 1
    %s24 = scalar_select %p21, %s22, %s23
    %p27 = pneg %p21
    %p28 = scmp.eq.s32.totalorder %s12, 1
    %p29 = por %p27, %p28
    %p30 = scmp.ne.s32.totalorder %s22, %s25
    %p31 = scmp.eq.s32.totalorder %s12, 0
    %p32 = por %p30, %p31
    %p33 = scmp.ne.s32.totalorder %s22, %s25
    %p34 = scmp.eq.s32.totalorder %s17, 1
    %p35 = por %p33, %p34
    %p36 = scmp.ne.s32.totalorder %s25, %s26
    %p37 = scmp.eq.s32.totalorder %s17, 0
    %p38 = por %p36, %p37
    %p39 = scmp.ne.s32.totalorder %s25, %s26
    %p40 = scmp.eq.s32.totalorder %s18, 1
    %p41 = por %p39, %p40
    %p43 = scmp.ne.s32.totalorder %s26, %s42
    %p44 = scmp.eq.s32.totalorder %s18, 0
    %p45 = por %p43, %p44
    %s47 = sadd.s32 %s46, 1
    %p50 = scmp.eq.s32.totalorder %s12, 1
    %p51 = scmp.ne.s32.totalorder %s46, %s48
    %p52 = scmp.eq.s32.totalorder %s12, 0
    %p53 = por %p51, %p52
    %p54 = scmp.ne.s32.totalorder %s46, %s48
    %p55 = scmp.eq.s32.totalorder %s17, 1
    %p56 = por %p54, %p55
    %p57 = scmp.ne.s32.totalorder %s48, %s49
    %p58 = scmp.eq.s32.totalorder %s17, 0
    %p59 = por %p57, %p58
    %p60 = scmp.ne.s32.totalorder %s48, %s49
    %p61 = scmp.eq.s32.totalorder %s18, 1
    %p62 = por %p60, %p61
    %p64 = scmp.ne.s32.totalorder %s49, %s63
    %p65 = scmp.eq.s32.totalorder %s18, 0
    %p66 = por %p64, %p65
    %s68 = sadd.s32 %s67, 1
    %p71 = scmp.eq.s32.totalorder %s12, 1
    %p72 = scmp.ne.s32.totalorder %s67, %s69
    %p73 = scmp.eq.s32.totalorder %s12, 0
    %p74 = por %p72, %p73
    %p75 = scmp.ne.s32.totalorder %s67, %s69
    %p76 = scmp.eq.s32.totalorder %s17, 1
    %p77 = por %p75, %p76
    %p78 = scmp.ne.s32.totalorder %s69, %s70
    %p79 = scmp.eq.s32.totalorder %s17, 0
    %p80 = por %p78, %p79
    %p81 = scmp.ne.s32.totalorder %s69, %s70
    %p82 = scmp.eq.s32.totalorder %s18, 1
    %p83 = por %p81, %p82
    %p85 = scmp.ne.s32.totalorder %s70, %s84
    %p86 = scmp.eq.s32.totalorder %s18, 0
    %p87 = por %p85, %p86
    %s88 = ssub.s32 %s12, %s19
    %p89 = scmp.eq.s32.totalorder %s88, 0
    %s91 = sadd.s32 %s90, 1
    %s92 = scalar_select %p89, %s90, %s91
    %p95 = pneg %p89
    %p96 = scmp.eq.s32.totalorder %s12, 1
    %p97 = por %p95, %p96
    %p98 = scmp.ne.s32.totalorder %s90, %s93
    %p99 = scmp.eq.s32.totalorder %s12, 0
    %p100 = por %p98, %p99
    %p101 = scmp.ne.s32.totalorder %s90, %s93
    %p102 = scmp.eq.s32.totalorder %s17, 1
    %p103 = por %p101, %p102
    %p104 = scmp.ne.s32.totalorder %s93, %s94
    %p105 = scmp.eq.s32.totalorder %s17, 0
    %p106 = por %p104, %p105
    %p107 = scmp.ne.s32.totalorder %s93, %s94
    %p108 = scmp.eq.s32.totalorder %s18, 1
    %p109 = por %p107, %p108
    %p111 = scmp.ne.s32.totalorder %s94, %s110
    %p112 = scmp.eq.s32.totalorder %s18, 0
    %p113 = por %p111, %p112
    %s114 = ssub.s32 %s12, %s19
    %p115 = scmp.eq.s32.totalorder %s114, 0
    %s117 = sadd.s32 %s116, 1
    %s118 = scalar_select %p115, %s116, %s117
    %p121 = pneg %p115
    %p122 = scmp.eq.s32.totalorder %s12, 1
    %p123 = por %p121, %p122
    %p124 = scmp.ne.s32.totalorder %s116, %s119
    %p125 = scmp.eq.s32.totalorder %s12, 0
    %p126 = por %p124, %p125
    %p127 = scmp.ne.s32.totalorder %s116, %s119
    %p128 = scmp.eq.s32.totalorder %s17, 1
    %p129 = por %p127, %p128
    %p130 = scmp.ne.s32.totalorder %s119, %s120
    %p131 = scmp.eq.s32.totalorder %s17, 0
    %p132 = por %p130, %p131
    %p133 = scmp.ne.s32.totalorder %s119, %s120
    %p134 = scmp.eq.s32.totalorder %s18, 1
    %p135 = por %p133, %p134
    %p137 = scmp.ne.s32.totalorder %s120, %s136
    %p138 = scmp.eq.s32.totalorder %s18, 0
    %p139 = por %p137, %p138
    %s140 = ssub.s32 %s12, %s19
    %p141 = scmp.eq.s32.totalorder %s140, 0
    %s143 = sadd.s32 %s142, 1
    %s144 = scalar_select %p141, %s142, %s143
    %p147 = pneg %p141
    %p148 = scmp.eq.s32.totalorder %s12, 1
    %p149 = por %p147, %p148
    %p150 = scmp.ne.s32.totalorder %s142, %s145
    %p151 = scmp.eq.s32.totalorder %s12, 0
    %p152 = por %p150, %p151
    %p153 = scmp.ne.s32.totalorder %s142, %s145
    %p154 = scmp.eq.s32.totalorder %s17, 1
    %p155 = por %p153, %p154
    %p156 = scmp.ne.s32.totalorder %s145, %s146
    %p157 = scmp.eq.s32.totalorder %s17, 0
    %p158 = por %p156, %p157
    %p159 = scmp.ne.s32.totalorder %s145, %s146
    %p160 = scmp.eq.s32.totalorder %s18, 1
    %p161 = por %p159, %p160
    %p163 = scmp.ne.s32.totalorder %s146, %s162
    %p164 = scmp.eq.s32.totalorder %s18, 0
    %p165 = por %p163, %p164
    %p166 = scmp.le.s32.totalorder 1, %s12
    %p167 = scmp.lt.s32.totalorder %s12, 3
    %p168 = pnand %p166, %p167
    %p169 = pneg %p168
    // Predicated region
    $region9: #{downsample_forward.3} parent=5 // pred_check
      _
    $region10: #{downsample_forward.3} parent=5 // pred_check_branch
      %171 = sbr.rel (%p168) target = $region12
    $region11: #{downsample_forward.3} parent=5 // pred_region
      %s172 = ssub.s32 %s12, 1
      // Predicated region
      $region13: #{downsample_forward.3} parent=11 // pred_check
        %p173 = pneg %p59
      $region14: #{downsample_forward.3} parent=11 // pred_check_branch
        %175 = sbr.rel (%p173) target = $region16
      $region15: #{downsample_forward.3} parent=11 // pred_region
        _
      $region16: #{downsample_forward.3} parent=11 // pred_fallthru
        _
      // Predicated region
      $region17: #{downsample_forward.3} parent=11 // pred_check
        %p176 = pneg %p80
      $region18: #{downsample_forward.3} parent=11 // pred_check_branch
        %178 = sbr.rel (%p176) target = $region20
      $region19: #{downsample_forward.3} parent=11 // pred_region
        _
      $region20: #{downsample_forward.3} parent=11 // pred_fallthru
        _
    $region12: #{downsample_forward.3} parent=5 // pred_fallthru
      _
    %p179 = scmp.lt.s32.totalorder %s12, 2
    // Predicated region
    $region21: #{downsample_forward.3} parent=5 // pred_check
      %p180 = pneg %p179
    $region22: #{downsample_forward.3} parent=5 // pred_check_branch
      %182 = sbr.rel (%p180) target = $region24
    $region23: #{downsample_forward.3} parent=5 // pred_region
      // Predicated region
      $region25: #{downsample_forward.3} parent=23 // pred_check
        %p183 = pneg %p32
      $region26: #{downsample_forward.3} parent=23 // pred_check_branch
        %185 = sbr.rel (%p183) target = $region28
      $region27: #{downsample_forward.3} parent=23 // pred_region
        %p186 = scmp.lt.s32.totalorder %s12, 1
        %s187 = scalar_select %p186, %s12, 1
        %s188 = smul.addr %s187, 16
        %s189 = smul.addr %s188, 8
        %s190 = scalar_lea.vmem %s0, %s189
      $region28: #{downsample_forward.3} parent=23 // pred_fallthru
        _
    $region24: #{downsample_forward.3} parent=5 // pred_fallthru
      _
    %p191 = scmp.le.s32.totalorder 1, %s12
    %p192 = scmp.lt.s32.totalorder %s12, 3
    %p193 = pnand %p191, %p192
    %p194 = pneg %p193
    // Predicated region
    $region29: #{downsample_forward.3} parent=5 // pred_check
      _
    $region30: #{downsample_forward.3} parent=5 // pred_check_branch
      %196 = sbr.rel (%p193) target = $region32
    $region31: #{downsample_forward.3} parent=5 // pred_region
      %s197 = ssub.s32 %s12, 1
      %p198 = scmp.lt.s32.totalorder %s17, 1
      %s199 = scalar_select %p198, %s17, 1
      %s200 = smul.addr %s199, 16
      %s201 = smul.addr %s200, 8
      %s202 = scalar_lea.vmem %s0, %s201
      %p203 = pneg %p38
      %p204 = pneg %p35
      %p205 = pneg %p59
      %p206 = pneg %p56
      %p207 = pneg %p80
      %p208 = pneg %p77
      %p209 = pneg %p106
      %p210 = pneg %p103
      %p211 = scmp.lt.s32.totalorder %s17, 1
      %s212 = scalar_select %p211, %s17, 1
      %s213 = smul.addr %s212, 8
      %s214 = smul.addr %s213, 8
      %s215 = scalar_lea.vmem %s3, %s214
      %p216 = pneg %p132
      %p217 = pneg %p129
      %p218 = scmp.lt.s32.totalorder %s17, 1
      %s219 = scalar_select %p218, %s17, 1
      %s220 = scalar_lea.vmem %s4, %s219
      %p221 = pneg %p158
      %p222 = pneg %p155
      %p223 = scmp.lt.s32.totalorder %s17, 1
      %s224 = scalar_select %p223, %s17, 1
      %s225 = scalar_lea.vmem %s5, %s224
      %p226 = scmp.lt.s32.totalorder %s17, 1
      %s227 = scalar_select %p226, %s17, 1
      %s228 = smul.addr %s227, 16
      %s229 = smul.addr %s228, 8
      %s230 = scalar_lea.vmem %s0, %s229
      %p231 = scmp.lt.s32.totalorder %s17, 1
      %s232 = scalar_select %p231, %s17, 1
      %s233 = smul.addr %s232, 8
      %s234 = smul.addr %s233, 8
      %s235 = scalar_lea.vmem %s3, %s234
      %p236 = scmp.lt.s32.totalorder %s17, 1
      %s237 = scalar_select %p236, %s17, 1
      %s238 = scalar_lea.vmem %s4, %s237
      %p239 = scmp.lt.s32.totalorder %s17, 1
      %s240 = scalar_select %p239, %s17, 1
      %s241 = scalar_lea.vmem %s5, %s240
      %v243 = vld [vmem:[%s230] sm:$0xff]
      %v244 = vld [vmem:[%s230 + $0x8] sm:$0xff]
      %v245 = vld [vmem:[%s230 + $0x10] sm:$0xff]
      %v246 = vld [vmem:[%s230 + $0x18] sm:$0xff]
      %v247 = vld [vmem:[%s230 + $0x20] sm:$0xff]
      %v248 = vld [vmem:[%s230 + $0x28] sm:$0xff]
      %v249 = vld [vmem:[%s230 + $0x30] sm:$0xff]
      %v250 = vld [vmem:[%s230 + $0x38] sm:$0xff]
      %v251 = vld [vmem:[%s230 + $0x40] sm:$0xff]
      %v252 = vld [vmem:[%s230 + $0x48] sm:$0xff]
      %v253 = vld [vmem:[%s230 + $0x50] sm:$0xff]
      %v254 = vld [vmem:[%s230 + $0x58] sm:$0xff]
      %v255 = vld [vmem:[%s230 + $0x60] sm:$0xff]
      %v256 = vld [vmem:[%s230 + $0x68] sm:$0xff]
      %v257 = vld [vmem:[%s230 + $0x70] sm:$0xff]
      %v258 = vld [vmem:[%s230 + $0x78] sm:$0xff]
      %275 = vrot.lane.b32.xlu0 %v243, 124
      %v276 = vpop.permute.xlu0 %275
      %277 = vrot.lane.b32.xlu0 %v244, 124
      %v278 = vpop.permute.xlu0 %277
      %279 = vrot.lane.b32.xlu0 %v245, 124
      %v280 = vpop.permute.xlu0 %279
      %281 = vrot.lane.b32.xlu0 %v246, 124
      %v282 = vpop.permute.xlu0 %281
      %283 = vrot.lane.b32.xlu0 %v247, 124
      %v284 = vpop.permute.xlu0 %283
      %285 = vrot.lane.b32.xlu0 %v248, 124
      %v286 = vpop.permute.xlu0 %285
      %287 = vrot.lane.b32.xlu0 %v249, 124
      %v288 = vpop.permute.xlu0 %287
      %289 = vrot.lane.b32.xlu0 %v250, 124
      %v290 = vpop.permute.xlu0 %289
      %291 = vrot.lane.b32.xlu0 %v251, 124
      %v292 = vpop.permute.xlu0 %291
      %293 = vrot.lane.b32.xlu0 %v252, 124
      %v294 = vpop.permute.xlu0 %293
      %295 = vrot.lane.b32.xlu0 %v253, 124
      %v296 = vpop.permute.xlu0 %295
      %297 = vrot.lane.b32.xlu0 %v254, 124
      %v298 = vpop.permute.xlu0 %297
      %299 = vrot.lane.b32.xlu0 %v255, 124
      %v300 = vpop.permute.xlu0 %299
      %301 = vrot.lane.b32.xlu0 %v256, 124
      %v302 = vpop.permute.xlu0 %301
      %303 = vrot.lane.b32.xlu0 %v257, 124
      %v304 = vpop.permute.xlu0 %303
      %305 = vrot.lane.b32.xlu0 %v258, 124
      %v306 = vpop.permute.xlu0 %305
      %v323 = vmax.f32 %v243, %v276
      %v324 = vmax.f32 %v244, %v278
      %v325 = vmax.f32 %v245, %v280
      %v326 = vmax.f32 %v246, %v282
      %v327 = vmax.f32 %v247, %v284
      %v328 = vmax.f32 %v248, %v286
      %v329 = vmax.f32 %v249, %v288
      %v330 = vmax.f32 %v250, %v290
      %v331 = vmax.f32 %v251, %v292
      %v332 = vmax.f32 %v252, %v294
      %v333 = vmax.f32 %v253, %v296
      %v334 = vmax.f32 %v254, %v298
      %v335 = vmax.f32 %v255, %v300
      %v336 = vmax.f32 %v256, %v302
      %v337 = vmax.f32 %v257, %v304
      %v338 = vmax.f32 %v258, %v306
      %v339 = vmax.f32 %v323, %v324
      %v340 = vmax.f32 %v325, %v326
      %v341 = vmax.f32 %v327, %v328
      %v342 = vmax.f32 %v329, %v330
      %v343 = vmax.f32 %v331, %v332
      %v344 = vmax.f32 %v333, %v334
      %v345 = vmax.f32 %v335, %v336
      %v346 = vmax.f32 %v337, %v338
      %vm347 = vcmask 31744
      %348 = vst.msk [vmem:[#allocation2] sm:$0xff] %vm347, 0.0
      %vm349 = vcmask 25600
      %350 = vst.msk [vmem:[#allocation2 + $0x8] sm:$0x3] %vm349, 0.0
      %351 = vst.msk [vmem:[#allocation2 + $0x10] sm:$0xff] %vm347, 0.0
      %352 = vst.msk [vmem:[#allocation2 + $0x18] sm:$0x3] %vm349, 0.0
      %353 = vst.msk [vmem:[#allocation2 + $0x20] sm:$0xff] %vm347, 0.0
      %354 = vst.msk [vmem:[#allocation2 + $0x28] sm:$0x3] %vm349, 0.0
      %355 = vst.msk [vmem:[#allocation2 + $0x30] sm:$0xff] %vm347, 0.0
      %356 = vst.msk [vmem:[#allocation2 + $0x38] sm:$0x3] %vm349, 0.0
      %357 = vst.msk [vmem:[#allocation2 + $0x40] sm:$0xff] %vm347, 0.0
      %358 = vst.msk [vmem:[#allocation2 + $0x48] sm:$0x3] %vm349, 0.0
      %359 = vst.msk [vmem:[#allocation2 + $0x50] sm:$0xff] %vm347, 0.0
      %360 = vst.msk [vmem:[#allocation2 + $0x58] sm:$0x3] %vm349, 0.0
      %361 = vst.msk [vmem:[#allocation2 + $0x60] sm:$0xff] %vm347, 0.0
      %362 = vst.msk [vmem:[#allocation2 + $0x68] sm:$0x3] %vm349, 0.0
      %363 = vst.msk [vmem:[#allocation2 + $0x70] sm:$0xff] %vm347, 0.0
      %364 = vst.msk [vmem:[#allocation2 + $0x78] sm:$0x3] %vm349, 0.0
      %365 = vst.msk [vmem:[#allocation2 + $0x80] sm:$0xff] %vm347, 0.0
      %366 = vst.msk [vmem:[#allocation2 + $0x88] sm:$0x3] %vm349, 0.0
      %367 = vst.msk [vmem:[#allocation2 + $0x90] sm:$0xff] %vm347, 0.0
      %368 = vst.msk [vmem:[#allocation2 + $0x98] sm:$0x3] %vm349, 0.0
      %s369 = scalar_lea.vmem [#allocation2], 16
      %370 = vst.msk [vmem:[%s369 + $0x1] sm:$0xff] %vm347, %v339
      %371 = vst.msk [vmem:[%s369 + $0x11] sm:$0xff] %vm347, %v340
      %372 = vst.msk [vmem:[%s369 + $0x21] sm:$0xff] %vm347, %v341
      %373 = vst.msk [vmem:[%s369 + $0x31] sm:$0xff] %vm347, %v342
      %374 = vst.msk [vmem:[%s369 + $0x41] sm:$0xff] %vm347, %v343
      %375 = vst.msk [vmem:[%s369 + $0x51] sm:$0xff] %vm347, %v344
      %376 = vst.msk [vmem:[%s369 + $0x61] sm:$0xff] %vm347, %v345
      %377 = vst.msk [vmem:[%s369 + $0x71] sm:$0xff] %vm347, %v346
      %v378 = vld [vmem:[#allocation2] sm:$0xff]
      %v379 = vld [vmem:[#allocation2 + $0x10] sm:$0xff]
      %v380 = vld [vmem:[#allocation2 + $0x20] sm:$0xff]
      %v381 = vld [vmem:[#allocation2 + $0x30] sm:$0xff]
      %v382 = vld [vmem:[#allocation2 + $0x40] sm:$0xff]
      %v383 = vld [vmem:[#allocation2 + $0x50] sm:$0xff]
      %v384 = vld [vmem:[#allocation2 + $0x60] sm:$0xff]
      %v385 = vld [vmem:[#allocation2 + $0x70] sm:$0xff]
      %v386 = vld [vmem:[#allocation2 + $0x1] sm:$0xff]
      %v387 = vld [vmem:[#allocation2 + $0x11] sm:$0xff]
      %v388 = vld [vmem:[#allocation2 + $0x21] sm:$0xff]
      %v389 = vld [vmem:[#allocation2 + $0x31] sm:$0xff]
      %v390 = vld [vmem:[#allocation2 + $0x41] sm:$0xff]
      %v391 = vld [vmem:[#allocation2 + $0x51] sm:$0xff]
      %v392 = vld [vmem:[#allocation2 + $0x61] sm:$0xff]
      %v393 = vld [vmem:[#allocation2 + $0x71] sm:$0xff]
      %v394 = vld [vmem:[#allocation2 + $0x2] sm:$0xff]
      %v395 = vld [vmem:[#allocation2 + $0x12] sm:$0xff]
      %v396 = vld [vmem:[#allocation2 + $0x22] sm:$0xff]
      %v397 = vld [vmem:[#allocation2 + $0x32] sm:$0xff]
      %v398 = vld [vmem:[#allocation2 + $0x42] sm:$0xff]
      %v399 = vld [vmem:[#allocation2 + $0x52] sm:$0xff]
      %v400 = vld [vmem:[#allocation2 + $0x62] sm:$0xff]
      %v401 = vld [vmem:[#allocation2 + $0x72] sm:$0xff]
      %v402 = vld [vmem:[%s369] sm:$0xff]
      %v403 = vld [vmem:[%s369 + $0x10] sm:$0xff]
      %v404 = vld [vmem:[%s369 + $0x20] sm:$0xff]
      %v405 = vld [vmem:[%s369 + $0x30] sm:$0xff]
      %v406 = vld [vmem:[%s369 + $0x40] sm:$0xff]
      %v407 = vld [vmem:[%s369 + $0x50] sm:$0xff]
      %v408 = vld [vmem:[%s369 + $0x60] sm:$0xff]
      %v409 = vld [vmem:[%s369 + $0x70] sm:$0xff]
      %v410 = vld [vmem:[%s369 + $0x1] sm:$0xff]
      %v411 = vld [vmem:[%s369 + $0x11] sm:$0xff]
      %v412 = vld [vmem:[%s369 + $0x21] sm:$0xff]
      %v413 = vld [vmem:[%s369 + $0x31] sm:$0xff]
      %v414 = vld [vmem:[%s369 + $0x41] sm:$0xff]
      %v415 = vld [vmem:[%s369 + $0x51] sm:$0xff]
      %v416 = vld [vmem:[%s369 + $0x61] sm:$0xff]
      %v417 = vld [vmem:[%s369 + $0x71] sm:$0xff]
      %v418 = vld [vmem:[%s369 + $0x2] sm:$0xff]
      %v419 = vld [vmem:[%s369 + $0x12] sm:$0xff]
      %v420 = vld [vmem:[%s369 + $0x22] sm:$0xff]
      %v421 = vld [vmem:[%s369 + $0x32] sm:$0xff]
      %v422 = vld [vmem:[%s369 + $0x42] sm:$0xff]
      %v423 = vld [vmem:[%s369 + $0x52] sm:$0xff]
      %v424 = vld [vmem:[%s369 + $0x62] sm:$0xff]
      %v425 = vld [vmem:[%s369 + $0x72] sm:$0xff]
      %s426 = scalar_lea.vmem [#allocation2], 32
      %v427 = vld [vmem:[%s426] sm:$0xff]
      %v428 = vld [vmem:[%s426 + $0x10] sm:$0xff]
      %v429 = vld [vmem:[%s426 + $0x20] sm:$0xff]
      %v430 = vld [vmem:[%s426 + $0x30] sm:$0xff]
      %v431 = vld [vmem:[%s426 + $0x40] sm:$0xff]
      %v432 = vld [vmem:[%s426 + $0x50] sm:$0xff]
      %v433 = vld [vmem:[%s426 + $0x60] sm:$0xff]
      %v434 = vld [vmem:[%s426 + $0x70] sm:$0xff]
      %v435 = vld [vmem:[%s426 + $0x1] sm:$0xff]
      %v436 = vld [vmem:[%s426 + $0x11] sm:$0xff]
      %v437 = vld [vmem:[%s426 + $0x21] sm:$0xff]
      %v438 = vld [vmem:[%s426 + $0x31] sm:$0xff]
      %v439 = vld [vmem:[%s426 + $0x41] sm:$0xff]
      %v440 = vld [vmem:[%s426 + $0x51] sm:$0xff]
      %v441 = vld [vmem:[%s426 + $0x61] sm:$0xff]
      %v442 = vld [vmem:[%s426 + $0x71] sm:$0xff]
      %v443 = vld [vmem:[%s426 + $0x2] sm:$0xff]
      %v444 = vld [vmem:[%s426 + $0x12] sm:$0xff]
      %v445 = vld [vmem:[%s426 + $0x22] sm:$0xff]
      %v446 = vld [vmem:[%s426 + $0x32] sm:$0xff]
      %v447 = vld [vmem:[%s426 + $0x42] sm:$0xff]
      %v448 = vld [vmem:[%s426 + $0x52] sm:$0xff]
      %v449 = vld [vmem:[%s426 + $0x62] sm:$0xff]
      %v450 = vld [vmem:[%s426 + $0x72] sm:$0xff]
      %459 = vrot.lane.b32.xlu0 %v386, 4
      %v460 = vpop.permute.xlu0 %459
      %461 = vrot.lane.b32.xlu0 %v387, 4
      %v462 = vpop.permute.xlu0 %461
      %463 = vrot.lane.b32.xlu0 %v388, 4
      %v464 = vpop.permute.xlu0 %463
      %465 = vrot.lane.b32.xlu0 %v389, 4
      %v466 = vpop.permute.xlu0 %465
      %467 = vrot.lane.b32.xlu0 %v390, 4
      %v468 = vpop.permute.xlu0 %467
      %469 = vrot.lane.b32.xlu0 %v391, 4
      %v470 = vpop.permute.xlu0 %469
      %471 = vrot.lane.b32.xlu0 %v392, 4
      %v472 = vpop.permute.xlu0 %471
      %473 = vrot.lane.b32.xlu0 %v393, 4
      %v474 = vpop.permute.xlu0 %473
      %491 = vrot.lane.b32.xlu0 %v394, 8
      %v492 = vpop.permute.xlu0 %491
      %493 = vrot.lane.b32.xlu0 %v395, 8
      %v494 = vpop.permute.xlu0 %493
      %495 = vrot.lane.b32.xlu0 %v396, 8
      %v496 = vpop.permute.xlu0 %495
      %497 = vrot.lane.b32.xlu0 %v397, 8
      %v498 = vpop.permute.xlu0 %497
      %499 = vrot.lane.b32.xlu0 %v398, 8
      %v500 = vpop.permute.xlu0 %499
      %501 = vrot.lane.b32.xlu0 %v399, 8
      %v502 = vpop.permute.xlu0 %501
      %503 = vrot.lane.b32.xlu0 %v400, 8
      %v504 = vpop.permute.xlu0 %503
      %505 = vrot.lane.b32.xlu0 %v401, 8
      %v506 = vpop.permute.xlu0 %505
      %523 = vrot.lane.b32.xlu0 %v402, 12
      %v524 = vpop.permute.xlu0 %523
      %525 = vrot.lane.b32.xlu0 %v403, 12
      %v526 = vpop.permute.xlu0 %525
      %527 = vrot.lane.b32.xlu0 %v404, 12
      %v528 = vpop.permute.xlu0 %527
      %529 = vrot.lane.b32.xlu0 %v405, 12
      %v530 = vpop.permute.xlu0 %529
      %531 = vrot.lane.b32.xlu0 %v406, 12
      %v532 = vpop.permute.xlu0 %531
      %533 = vrot.lane.b32.xlu0 %v407, 12
      %v534 = vpop.permute.xlu0 %533
      %535 = vrot.lane.b32.xlu0 %v408, 12
      %v536 = vpop.permute.xlu0 %535
      %537 = vrot.lane.b32.xlu0 %v409, 12
      %v538 = vpop.permute.xlu0 %537
      %555 = vrot.lane.b32.xlu0 %v410, 16
      %v556 = vpop.permute.xlu0 %555
      %557 = vrot.lane.b32.xlu0 %v411, 16
      %v558 = vpop.permute.xlu0 %557
      %559 = vrot.lane.b32.xlu0 %v412, 16
      %v560 = vpop.permute.xlu0 %559
      %561 = vrot.lane.b32.xlu0 %v413, 16
      %v562 = vpop.permute.xlu0 %561
      %563 = vrot.lane.b32.xlu0 %v414, 16
      %v564 = vpop.permute.xlu0 %563
      %565 = vrot.lane.b32.xlu0 %v415, 16
      %v566 = vpop.permute.xlu0 %565
      %567 = vrot.lane.b32.xlu0 %v416, 16
      %v568 = vpop.permute.xlu0 %567
      %569 = vrot.lane.b32.xlu0 %v417, 16
      %v570 = vpop.permute.xlu0 %569
      %587 = vrot.lane.b32.xlu0 %v418, 20
      %v588 = vpop.permute.xlu0 %587
      %589 = vrot.lane.b32.xlu0 %v419, 20
      %v590 = vpop.permute.xlu0 %589
      %591 = vrot.lane.b32.xlu0 %v420, 20
      %v592 = vpop.permute.xlu0 %591
      %593 = vrot.lane.b32.xlu0 %v421, 20
      %v594 = vpop.permute.xlu0 %593
      %595 = vrot.lane.b32.xlu0 %v422, 20
      %v596 = vpop.permute.xlu0 %595
      %597 = vrot.lane.b32.xlu0 %v423, 20
      %v598 = vpop.permute.xlu0 %597
      %599 = vrot.lane.b32.xlu0 %v424, 20
      %v600 = vpop.permute.xlu0 %599
      %601 = vrot.lane.b32.xlu0 %v425, 20
      %v602 = vpop.permute.xlu0 %601
      %619 = vrot.lane.b32.xlu0 %v427, 24
      %v620 = vpop.permute.xlu0 %619
      %621 = vrot.lane.b32.xlu0 %v428, 24
      %v622 = vpop.permute.xlu0 %621
      %623 = vrot.lane.b32.xlu0 %v429, 24
      %v624 = vpop.permute.xlu0 %623
      %625 = vrot.lane.b32.xlu0 %v430, 24
      %v626 = vpop.permute.xlu0 %625
      %627 = vrot.lane.b32.xlu0 %v431, 24
      %v628 = vpop.permute.xlu0 %627
      %629 = vrot.lane.b32.xlu0 %v432, 24
      %v630 = vpop.permute.xlu0 %629
      %631 = vrot.lane.b32.xlu0 %v433, 24
      %v632 = vpop.permute.xlu0 %631
      %633 = vrot.lane.b32.xlu0 %v434, 24
      %v634 = vpop.permute.xlu0 %633
      %651 = vrot.lane.b32.xlu0 %v435, 28
      %v652 = vpop.permute.xlu0 %651
      %653 = vrot.lane.b32.xlu0 %v436, 28
      %v654 = vpop.permute.xlu0 %653
      %655 = vrot.lane.b32.xlu0 %v437, 28
      %v656 = vpop.permute.xlu0 %655
      %657 = vrot.lane.b32.xlu0 %v438, 28
      %v658 = vpop.permute.xlu0 %657
      %659 = vrot.lane.b32.xlu0 %v439, 28
      %v660 = vpop.permute.xlu0 %659
      %661 = vrot.lane.b32.xlu0 %v440, 28
      %v662 = vpop.permute.xlu0 %661
      %663 = vrot.lane.b32.xlu0 %v441, 28
      %v664 = vpop.permute.xlu0 %663
      %665 = vrot.lane.b32.xlu0 %v442, 28
      %v666 = vpop.permute.xlu0 %665
      %683 = vrot.lane.b32.xlu0 %v443, 32
      %v684 = vpop.permute.xlu0 %683
      %685 = vrot.lane.b32.xlu0 %v444, 32
      %v686 = vpop.permute.xlu0 %685
      %687 = vrot.lane.b32.xlu0 %v445, 32
      %v688 = vpop.permute.xlu0 %687
      %689 = vrot.lane.b32.xlu0 %v446, 32
      %v690 = vpop.permute.xlu0 %689
      %691 = vrot.lane.b32.xlu0 %v447, 32
      %v692 = vpop.permute.xlu0 %691
      %693 = vrot.lane.b32.xlu0 %v448, 32
      %v694 = vpop.permute.xlu0 %693
      %695 = vrot.lane.b32.xlu0 %v449, 32
      %v696 = vpop.permute.xlu0 %695
      %697 = vrot.lane.b32.xlu0 %v450, 32
      %v698 = vpop.permute.xlu0 %697
      %v707 = vsel %vm347, %v378, %v460
      %v708 = vsel %vm347, %v379, %v462
      %v709 = vsel %vm347, %v380, %v464
      %v710 = vsel %vm347, %v381, %v466
      %v711 = vsel %vm347, %v382, %v468
      %v712 = vsel %vm347, %v383, %v470
      %v713 = vsel %vm347, %v384, %v472
      %v714 = vsel %vm347, %v385, %v474
      %vm715 = vcmask 64512
      %v716 = vsel %vm715, %v707, %v492
      %v717 = vsel %vm715, %v708, %v494
      %v718 = vsel %vm715, %v709, %v496
      %v719 = vsel %vm715, %v710, %v498
      %v720 = vsel %vm715, %v711, %v500
      %v721 = vsel %vm715, %v712, %v502
      %v722 = vsel %vm715, %v713, %v504
      %v723 = vsel %vm715, %v714, %v506
      %vm724 = vcmask 97280
      %v725 = vsel %vm724, %v716, %v524
      %v726 = vsel %vm724, %v717, %v526
      %v727 = vsel %vm724, %v718, %v528
      %v728 = vsel %vm724, %v719, %v530
      %v729 = vsel %vm724, %v720, %v532
      %v730 = vsel %vm724, %v721, %v534
      %v731 = vsel %vm724, %v722, %v536
      %v732 = vsel %vm724, %v723, %v538
      %vm733 = vcmask 130048
      %v734 = vsel %vm733, %v725, %v556
      %v735 = vsel %vm733, %v726, %v558
      %v736 = vsel %vm733, %v727, %v560
      %v737 = vsel %vm733, %v728, %v562
      %v738 = vsel %vm733, %v729, %v564
      %v739 = vsel %vm733, %v730, %v566
      %v740 = vsel %vm733, %v731, %v568
      %v741 = vsel %vm733, %v732, %v570
      %vm742 = vcmask 162816
      %v743 = vsel %vm742, %v734, %v588
      %v744 = vsel %vm742, %v735, %v590
      %v745 = vsel %vm742, %v736, %v592
      %v746 = vsel %vm742, %v737, %v594
      %v747 = vsel %vm742, %v738, %v596
      %v748 = vsel %vm742, %v739, %v598
      %v749 = vsel %vm742, %v740, %v600
      %v750 = vsel %vm742, %v741, %v602
      %vm751 = vcmask 195584
      %v752 = vsel %vm751, %v743, %v620
      %v753 = vsel %vm751, %v744, %v622
      %v754 = vsel %vm751, %v745, %v624
      %v755 = vsel %vm751, %v746, %v626
      %v756 = vsel %vm751, %v747, %v628
      %v757 = vsel %vm751, %v748, %v630
      %v758 = vsel %vm751, %v749, %v632
      %v759 = vsel %vm751, %v750, %v634
      %vm760 = vcmask 228352
      %v761 = vsel %vm760, %v752, %v652
      %v762 = vsel %vm760, %v753, %v654
      %v763 = vsel %vm760, %v754, %v656
      %v764 = vsel %vm760, %v755, %v658
      %v765 = vsel %vm760, %v756, %v660
      %v766 = vsel %vm760, %v757, %v662
      %v767 = vsel %vm760, %v758, %v664
      %v768 = vsel %vm760, %v759, %v666
      %vm769 = vcmask 261120
      %v770 = vsel %vm769, %v761, %v684
      %v771 = vsel %vm769, %v762, %v686
      %v772 = vsel %vm769, %v763, %v688
      %v773 = vsel %vm769, %v764, %v690
      %v774 = vsel %vm769, %v765, %v692
      %v775 = vsel %vm769, %v766, %v694
      %v776 = vsel %vm769, %v767, %v696
      %v777 = vsel %vm769, %v768, %v698
      %v778 = vpack.c.bf16 %v771, %v770
      %v779 = vpack.c.bf16 %v773, %v772
      %v780 = vpack.c.bf16 %v775, %v774
      %v781 = vpack.c.bf16 %v777, %v776
      %v782 = vld [vmem:[%s1] sm:$0xf]
      %v783 = vld [vmem:[%s1 + $0x4] sm:$0xf]
      %v784 = vld [vmem:[%s1 + $0x8] sm:$0xf]
      %v785 = vld [vmem:[%s1 + $0xc] sm:$0xf]
      %v786 = vld [vmem:[%s1 + $0x10] sm:$0x3]
      %v787 = vld [vmem:[%s2] sm:$0x1]
      %v789 = vlaneseq
      %v790 = vshrl.u32 %v789, 7
      %v791 = vsub.s32 0, %v790
      %v792 = vrot.slane %v787, %v791
      %v799 = vunpack.c.l.b16 %v782
      %v800 = vunpack.c.l.b16 %v783
      %v801 = vunpack.c.l.b16 %v784
      %v802 = vunpack.c.l.b16 %v785
      %v803 = vunpack.c.l.b16 %v786
      %v804 = vpack.c.b16 %v800, %v799
      %v805 = vpack.c.b16 %v802, %v801
      %v806 = vpack.c.b16 %v803, %v803
      %vm809 = vcmask 293888
      %v811 = vsel %vm809, %v778, 0
      %v814 = vsel %vm809, %v779, 0
      %v817 = vsel %vm809, %v780, 0
      %v820 = vsel %vm809, %v781, 0
      %vm822 = vcmask 1041408
      %v824 = vsel %vm822, %v806, 0
      %826 = vmatprep.subr.bf16.mxu0 0
      %827 = vmatpush1.bf16.msra.mxu0 %v804
      %828 = vmatprep.subr.bf16.mxu0 0
      %829 = vmatpush1.bf16.msra.mxu0 %v805
      %830 = vmatprep.subr.bf16.mxu0 0
      %831 = vmatpush1.bf16.msra.mxu0 %v824
      %832 = vmatprep.subr.bf16.mxu0 0
      %833 = vmatpush1.bf16.msra.mxu0 0
      %834 = vmatprep.subr.bf16.mxu0 0
      %835 = vmatpush1.bf16.msra.mxu0 0
      %836 = vmatprep.subr.bf16.mxu0 0
      %837 = vmatpush1.bf16.msra.mxu0 0
      %838 = vmatprep.subr.bf16.mxu0 0
      %839 = vmatpush1.bf16.msra.mxu0 0
      %840 = vmatprep.subr.bf16.mxu0 0
      %841 = vmatpush1.bf16.msra.mxu0 0
      %842 = vmatprep.subr.bf16.mxu0 0
      %843 = vmatpush1.bf16.msra.mxu0 0
      %844 = vmatprep.subr.bf16.mxu0 0
      %845 = vmatpush1.bf16.msra.mxu0 0
      %846 = vmatprep.subr.bf16.mxu0 0
      %847 = vmatpush1.bf16.msra.mxu0 0
      %848 = vmatprep.subr.bf16.mxu0 0
      %849 = vmatpush1.bf16.msra.mxu0 0
      %850 = vmatprep.subr.bf16.mxu0 0
      %851 = vmatpush1.bf16.msra.mxu0 0
      %852 = vmatprep.subr.bf16.mxu0 0
      %853 = vmatpush1.bf16.msra.mxu0 0
      %854 = vmatprep.subr.bf16.mxu0 0
      %855 = vmatpush1.bf16.msra.mxu0 0
      %856 = vmatprep.subr.bf16.mxu0 0
      %857 = vmatpush1.bf16.msra.mxu0 0
      %858 = vmatprep.mubr.bf16.mxu0 0
      %859 = vmatmul.mubr.bf16.gmra.mrb[0].mxu0 %v811
      %v860 = vpop.f32.mrb[0].mxu0
      %v861 = vadd.f32 %v792, %v860
      %v862 = vpop.f32.mrb[0].mxu0
      %v863 = vpop.f32.mrb[0].mxu0
      %v864 = vadd.f32 %v792, %v863
      %v865 = vpop.f32.mrb[0].mxu0
      %866 = vmatprep.mubr.bf16.mxu0 0
      %867 = vmatmul.mubr.bf16.gmra.mrb[0].mxu0 %v814
      %v868 = vpop.f32.mrb[0].mxu0
      %v869 = vadd.f32 %v792, %v868
      %v870 = vpop.f32.mrb[0].mxu0
      %v871 = vpop.f32.mrb[0].mxu0
      %v872 = vadd.f32 %v792, %v871
      %v873 = vpop.f32.mrb[0].mxu0
      %874 = vmatprep.mubr.bf16.mxu0 0
      %875 = vmatmul.mubr.bf16.gmra.mrb[0].mxu0 %v817
      %v876 = vpop.f32.mrb[0].mxu0
      %v877 = vadd.f32 %v792, %v876
      %v878 = vpop.f32.mrb[0].mxu0
      %v879 = vpop.f32.mrb[0].mxu0
      %v880 = vadd.f32 %v792, %v879
      %v881 = vpop.f32.mrb[0].mxu0
      %882 = vmatprep.mubr.bf16.mxu0 0
      %883 = vmatmul.mubr.bf16.gmra.mrb[0].mxu0 %v820
      %v884 = vpop.f32.mrb[0].mxu0
      %v885 = vadd.f32 %v792, %v884
      %v886 = vpop.f32.mrb[0].mxu0
      %v887 = vpop.f32.mrb[0].mxu0
      %v888 = vadd.f32 %v792, %v887
      %v889 = vpop.f32.mrb[0].mxu0
      %890 = vdwg.mxu0
      %891 = vst.msk [vmem:[%s235] sm:$0xff] %vm715, %v861
      %892 = vst.msk [vmem:[%s235 + $0x8] sm:$0xff] %vm715, %v864
      %893 = vst.msk [vmem:[%s235 + $0x10] sm:$0xff] %vm715, %v869
      %894 = vst.msk [vmem:[%s235 + $0x18] sm:$0xff] %vm715, %v872
      %895 = vst.msk [vmem:[%s235 + $0x20] sm:$0xff] %vm715, %v877
      %896 = vst.msk [vmem:[%s235 + $0x28] sm:$0xff] %vm715, %v880
      %897 = vst.msk [vmem:[%s235 + $0x30] sm:$0xff] %vm715, %v885
      %898 = vst.msk [vmem:[%s235 + $0x38] sm:$0xff] %vm715, %v888
      %v899 = vsel %vm715, %v861, 0.0
      %v900 = vsel %vm715, %v864, 0.0
      %v901 = vadd.f32 %v899, %v900
      %v902 = vsel %vm715, %v869, 0.0
      %v903 = vadd.f32 %v901, %v902
      %v904 = vsel %vm715, %v872, 0.0
      %v905 = vadd.f32 %v903, %v904
      %v906 = vsel %vm715, %v877, 0.0
      %v907 = vadd.f32 %v905, %v906
      %v908 = vsel %vm715, %v880, 0.0
      %v909 = vadd.f32 %v907, %v908
      %v910 = vsel %vm715, %v885, 0.0
      %v911 = vadd.f32 %v909, %v910
      %v912 = vsel %vm715, %v888, 0.0
      %v913 = vadd.f32 %v911, %v912
      %v914 = vrot.slane %v913, 4
      %v915 = vadd.f32 %v913, %v914
      %v916 = vrot.slane %v915, 2
      %v917 = vadd.f32 %v915, %v916
      %v918 = vrot.slane %v917, 1
      %v919 = vadd.f32 %v917, %v918
      %vm920 = vcmask 57344
      %921 = vst.msk [vmem:[%s238] sm:$0x1] %vm920, %v919
      %v922 = vmul.f32 %v861, %v861
      %v923 = vmul.f32 %v864, %v864
      %v924 = vmul.f32 %v869, %v869
      %v925 = vmul.f32 %v872, %v872
      %v926 = vmul.f32 %v877, %v877
      %v927 = vmul.f32 %v880, %v880
      %v928 = vmul.f32 %v885, %v885
      %v929 = vmul.f32 %v888, %v888
      %v930 = vsel %vm715, %v922, 0.0
      %v931 = vsel %vm715, %v923, 0.0
      %v932 = vadd.f32 %v930, %v931
      %v933 = vsel %vm715, %v924, 0.0
      %v934 = vadd.f32 %v932, %v933
      %v935 = vsel %vm715, %v925, 0.0
      %v936 = vadd.f32 %v934, %v935
      %v937 = vsel %vm715, %v926, 0.0
      %v938 = vadd.f32 %v936, %v937
      %v939 = vsel %vm715, %v927, 0.0
      %v940 = vadd.f32 %v938, %v939
      %v941 = vsel %vm715, %v928, 0.0
      %v942 = vadd.f32 %v940, %v941
      %v943 = vsel %vm715, %v929, 0.0
      %v944 = vadd.f32 %v942, %v943
      %v945 = vrot.slane %v944, 4
      %v946 = vadd.f32 %v944, %v945
      %v947 = vrot.slane %v946, 2
      %v948 = vadd.f32 %v946, %v947
      %v949 = vrot.slane %v948, 1
      %v950 = vadd.f32 %v948, %v949
      %951 = vst.msk [vmem:[%s241] sm:$0x1] %vm920, %v950
      %p952 = scmp.lt.s32.totalorder %s17, 1
      %s953 = scalar_select %p952, %s17, 1
      %s954 = smul.addr %s953, 8
      %s955 = smul.addr %s954, 8
      %s956 = scalar_lea.vmem %s3, %s955
      %p957 = scmp.lt.s32.totalorder %s17, 1
      %s958 = scalar_select %p957, %s17, 1
      %s959 = scalar_lea.vmem %s4, %s958
      %p960 = scmp.lt.s32.totalorder %s17, 1
      %s961 = scalar_select %p960, %s17, 1
      %s962 = scalar_lea.vmem %s5, %s961
      // Predicated region
      $region33: #{downsample_forward.3} parent=31 // pred_check
        %p963 = pneg %p103
      $region34: #{downsample_forward.3} parent=31 // pred_check_branch
        %965 = sbr.rel (%p963) target = $region36
      $region35: #{downsample_forward.3} parent=31 // pred_region
        _
      $region36: #{downsample_forward.3} parent=31 // pred_fallthru
        _
      // Predicated region
      $region37: #{downsample_forward.3} parent=31 // pred_check
        %p966 = pneg %p129
      $region38: #{downsample_forward.3} parent=31 // pred_check_branch
        %968 = sbr.rel (%p966) target = $region40
      $region39: #{downsample_forward.3} parent=31 // pred_region
        _
      $region40: #{downsample_forward.3} parent=31 // pred_fallthru
        _
      // Predicated region
      $region41: #{downsample_forward.3} parent=31 // pred_check
        %p969 = pneg %p155
      $region42: #{downsample_forward.3} parent=31 // pred_check_branch
        %971 = sbr.rel (%p969) target = $region44
      $region43: #{downsample_forward.3} parent=31 // pred_region
        _
      $region44: #{downsample_forward.3} parent=31 // pred_fallthru
        _
    $region32: #{downsample_forward.3} parent=5 // pred_fallthru
      _
    %p972 = scmp.le.s32.totalorder 2, %s12
    // Predicated region
    $region45: #{downsample_forward.3} parent=5 // pred_check
      %p973 = pneg %p972
    $region46: #{downsample_forward.3} parent=5 // pred_check_branch
      %975 = sbr.rel (%p973) target = $region48
    $region47: #{downsample_forward.3} parent=5 // pred_region
      %s976 = ssub.s32 %s12, 2
      // Predicated region
      $region49: #{downsample_forward.3} parent=47 // pred_check
        %p977 = pneg %p109
      $region50: #{downsample_forward.3} parent=47 // pred_check_branch
        %979 = sbr.rel (%p977) target = $region52
      $region51: #{downsample_forward.3} parent=47 // pred_region
        %p980 = scmp.lt.s32.totalorder %s18, 1
        %s981 = scalar_select %p980, %s18, 1
        %s982 = smul.addr %s981, 8
        %s983 = smul.addr %s982, 8
        %s984 = scalar_lea.vmem %s3, %s983
      $region52: #{downsample_forward.3} parent=47 // pred_fallthru
        _
      // Predicated region
      $region53: #{downsample_forward.3} parent=47 // pred_check
        %p985 = pneg %p135
      $region54: #{downsample_forward.3} parent=47 // pred_check_branch
        %987 = sbr.rel (%p985) target = $region56
      $region55: #{downsample_forward.3} parent=47 // pred_region
        %p988 = scmp.lt.s32.totalorder %s18, 1
        %s989 = scalar_select %p988, %s18, 1
        %s990 = scalar_lea.vmem %s4, %s989
      $region56: #{downsample_forward.3} parent=47 // pred_fallthru
        _
      // Predicated region
      $region57: #{downsample_forward.3} parent=47 // pred_check
        %p991 = pneg %p161
      $region58: #{downsample_forward.3} parent=47 // pred_check_branch
        %993 = sbr.rel (%p991) target = $region60
      $region59: #{downsample_forward.3} parent=47 // pred_region
        %p994 = scmp.lt.s32.totalorder %s18, 1
        %s995 = scalar_select %p994, %s18, 1
        %s996 = scalar_lea.vmem %s5, %s995
      $region60: #{downsample_forward.3} parent=47 // pred_fallthru
        _
    $region48: #{downsample_forward.3} parent=5 // pred_fallthru
      _
  $region6: #{downsample_forward.3} parent=0 // loop_footer
    %s16 = sadd.s32 1, %s12
  $region7: #{downsample_forward.3} parent=0 // loop_footer_branch
    %11 = sbr.rel target = $region3
  $region8: #{downsample_forward.3} parent=0 // loop_exit
    _

// kernel: downsample_forward.4
$region0: #{downsample_forward.4}
  #allocation0 [shape = 'u32[]', space=smem, size = 0x4, offset = 0x4, fixed_abs, tag = 'smem constant byte address 0x4 - core index']
  #allocation1 [shape = 'u32[144,128]{1,0:T(1,128)}', space=vmem, size = 0x12000, scoped, tag = 'internal scratch']
  #allocation2 [shape = 'f32[10,10,8]{2,1,0:T(8,128)}', space=vmem, size = 0x14000, scoped, tag = 'scratch operand']
  %s0 = inlined_call_operand.vmem [shape: f32[2,64,8], index: 0, kind: input, shape index: {}]
  %s1 = inlined_call_operand.vmem [shape: f32[1,8], index: 1, kind: input, shape index: {}]
  %s2 = inlined_call_operand.vmem [shape: f32[1,8], index: 2, kind: input, shape index: {}]
  %s3 = inlined_call_operand.vmem [shape: bf16[72,8], index: 3, kind: input, shape index: {}]
  %s4 = inlined_call_operand.vmem [shape: f32[1,8], index: 4, kind: input, shape index: {}]
  %s5 = inlined_call_operand.vmem [shape: f32[2,64,8], index: 5, kind: output, shape index: {0}]
  %s6 = inlined_call_operand.vmem [shape: f32[2,1,8], index: 6, kind: output, shape index: {1}]
  %s7 = inlined_call_operand.vmem [shape: f32[2,1,8], index: 7, kind: output, shape index: {2}]
  %8 = xla_tuple %s5, %s6, %s7
  %s9 = sld [smem:[#allocation0]]
  $region69: #{downsample_forward.4} parent=0
    _
  %s11 = ssub.s32 1, %s9
  %s12 = scalar_select 0, %s11, %s9
  loop: start=0, step=1, limit=4
  $region2: #{downsample_forward.4} parent=0 // loop_pre_header
    _
  $region3: #{downsample_forward.4} parent=0 // loop_header
    %s14 = sphi 0, %s18
    %p15 = scmp.ge.s32.totalorder %s14, 4
    %s24 = sphi 0, %s26
    %s27 = sphi 0, %s24
    %s28 = sphi 0, %s27
    %s44 = sphi 0, %s28
    %s48 = sphi 0, %s48
    %s50 = sphi 0, %s48
    %s51 = sphi 0, %s50
    %s65 = sphi 0, %s51
    %s69 = sphi 0, %s69
    %s71 = sphi 0, %s69
    %s72 = sphi 0, %s71
    %s86 = sphi 0, %s72
    %s90 = sphi 0, %s90
    %s92 = sphi 0, %s90
    %s93 = sphi 0, %s92
    %s107 = sphi 0, %s93
    %s111 = sphi 0, %s111
    %s113 = sphi 0, %s111
    %s114 = sphi 0, %s113
    %s128 = sphi 0, %s114
    %s134 = sphi 0, %s136
    %s137 = sphi 0, %s134
    %s138 = sphi 0, %s137
    %s154 = sphi 0, %s138
    %s160 = sphi 0, %s162
    %s163 = sphi 0, %s160
    %s164 = sphi 0, %s163
    %s180 = sphi 0, %s164
    %s186 = sphi 0, %s188
    %s189 = sphi 0, %s186
    %s190 = sphi 0, %s189
    %s206 = sphi 0, %s190
  $region4: #{downsample_forward.4} parent=0 // loop_header_branch
    %17 = sbr.rel (%p15) target = $region8
  $region5: #{downsample_forward.4} parent=0 // loop_body
    %s19 = ssub.s32 %s14, 1
    %s20 = ssub.s32 %s14, 2
    %s21 = sadd.s32 %s14, 1
    %s22 = ssub.s32 %s14, %s21
    %p23 = scmp.eq.s32.totalorder %s22, 0
    %s25 = sadd.s32 %s24, 1
    %s26 = scalar_select %p23, %s24, %s25
    %p29 = pneg %p23
    %p30 = scmp.eq.s32.totalorder %s14, 1
    %p31 = por %p29, %p30
    %p32 = scmp.ne.s32.totalorder %s24, %s27
    %p33 = scmp.eq.s32.totalorder %s14, 0
    %p34 = por %p32, %p33
    %p35 = scmp.ne.s32.totalorder %s24, %s27
    %p36 = scmp.eq.s32.totalorder %s19, 1
    %p37 = por %p35, %p36
    %p38 = scmp.ne.s32.totalorder %s27, %s28
    %p39 = scmp.eq.s32.totalorder %s19, 0
    %p40 = por %p38, %p39
    %p41 = scmp.ne.s32.totalorder %s27, %s28
    %p42 = scmp.eq.s32.totalorder %s20, 1
    %p43 = por %p41, %p42
    %p45 = scmp.ne.s32.totalorder %s28, %s44
    %p46 = scmp.eq.s32.totalorder %s20, 0
    %p47 = por %p45, %p46
    %s49 = sadd.s32 %s48, 1
    %p52 = scmp.eq.s32.totalorder %s14, 1
    %p53 = scmp.ne.s32.totalorder %s48, %s50
    %p54 = scmp.eq.s32.totalorder %s14, 0
    %p55 = por %p53, %p54
    %p56 = scmp.ne.s32.totalorder %s48, %s50
    %p57 = scmp.eq.s32.totalorder %s19, 1
    %p58 = por %p56, %p57
    %p59 = scmp.ne.s32.totalorder %s50, %s51
    %p60 = scmp.eq.s32.totalorder %s19, 0
    %p61 = por %p59, %p60
    %p62 = scmp.ne.s32.totalorder %s50, %s51
    %p63 = scmp.eq.s32.totalorder %s20, 1
    %p64 = por %p62, %p63
    %p66 = scmp.ne.s32.totalorder %s51, %s65
    %p67 = scmp.eq.s32.totalorder %s20, 0
    %p68 = por %p66, %p67
    %s70 = sadd.s32 %s69, 1
    %p73 = scmp.eq.s32.totalorder %s14, 1
    %p74 = scmp.ne.s32.totalorder %s69, %s71
    %p75 = scmp.eq.s32.totalorder %s14, 0
    %p76 = por %p74, %p75
    %p77 = scmp.ne.s32.totalorder %s69, %s71
    %p78 = scmp.eq.s32.totalorder %s19, 1
    %p79 = por %p77, %p78
    %p80 = scmp.ne.s32.totalorder %s71, %s72
    %p81 = scmp.eq.s32.totalorder %s19, 0
    %p82 = por %p80, %p81
    %p83 = scmp.ne.s32.totalorder %s71, %s72
    %p84 = scmp.eq.s32.totalorder %s20, 1
    %p85 = por %p83, %p84
    %p87 = scmp.ne.s32.totalorder %s72, %s86
    %p88 = scmp.eq.s32.totalorder %s20, 0
    %p89 = por %p87, %p88
    %s91 = sadd.s32 %s90, 1
    %p94 = scmp.eq.s32.totalorder %s14, 1
    %p95 = scmp.ne.s32.totalorder %s90, %s92
    %p96 = scmp.eq.s32.totalorder %s14, 0
    %p97 = por %p95, %p96
    %p98 = scmp.ne.s32.totalorder %s90, %s92
    %p99 = scmp.eq.s32.totalorder %s19, 1
    %p100 = por %p98, %p99
    %p101 = scmp.ne.s32.totalorder %s92, %s93
    %p102 = scmp.eq.s32.totalorder %s19, 0
    %p103 = por %p101, %p102
    %p104 = scmp.ne.s32.totalorder %s92, %s93
    %p105 = scmp.eq.s32.totalorder %s20, 1
    %p106 = por %p104, %p105
    %p108 = scmp.ne.s32.totalorder %s93, %s107
    %p109 = scmp.eq.s32.totalorder %s20, 0
    %p110 = por %p108, %p109
    %s112 = sadd.s32 %s111, 1
    %p115 = scmp.eq.s32.totalorder %s14, 1
    %p116 = scmp.ne.s32.totalorder %s111, %s113
    %p117 = scmp.eq.s32.totalorder %s14, 0
    %p118 = por %p116, %p117
    %p119 = scmp.ne.s32.totalorder %s111, %s113
    %p120 = scmp.eq.s32.totalorder %s19, 1
    %p121 = por %p119, %p120
    %p122 = scmp.ne.s32.totalorder %s113, %s114
    %p123 = scmp.eq.s32.totalorder %s19, 0
    %p124 = por %p122, %p123
    %p125 = scmp.ne.s32.totalorder %s113, %s114
    %p126 = scmp.eq.s32.totalorder %s20, 1
    %p127 = por %p125, %p126
    %p129 = scmp.ne.s32.totalorder %s114, %s128
    %p130 = scmp.eq.s32.totalorder %s20, 0
    %p131 = por %p129, %p130
    %s132 = ssub.s32 %s14, %s21
    %p133 = scmp.eq.s32.totalorder %s132, 0
    %s135 = sadd.s32 %s134, 1
    %s136 = scalar_select %p133, %s134, %s135
    %p139 = pneg %p133
    %p140 = scmp.eq.s32.totalorder %s14, 1
    %p141 = por %p139, %p140
    %p142 = scmp.ne.s32.totalorder %s134, %s137
    %p143 = scmp.eq.s32.totalorder %s14, 0
    %p144 = por %p142, %p143
    %p145 = scmp.ne.s32.totalorder %s134, %s137
    %p146 = scmp.eq.s32.totalorder %s19, 1
    %p147 = por %p145, %p146
    %p148 = scmp.ne.s32.totalorder %s137, %s138
    %p149 = scmp.eq.s32.totalorder %s19, 0
    %p150 = por %p148, %p149
    %p151 = scmp.ne.s32.totalorder %s137, %s138
    %p152 = scmp.eq.s32.totalorder %s20, 1
    %p153 = por %p151, %p152
    %p155 = scmp.ne.s32.totalorder %s138, %s154
    %p156 = scmp.eq.s32.totalorder %s20, 0
    %p157 = por %p155, %p156
    %s158 = ssub.s32 %s14, %s21
    %p159 = scmp.eq.s32.totalorder %s158, 0
    %s161 = sadd.s32 %s160, 1
    %s162 = scalar_select %p159, %s160, %s161
    %p165 = pneg %p159
    %p166 = scmp.eq.s32.totalorder %s14, 1
    %p167 = por %p165, %p166
    %p168 = scmp.ne.s32.totalorder %s160, %s163
    %p169 = scmp.eq.s32.totalorder %s14, 0
    %p170 = por %p168, %p169
    %p171 = scmp.ne.s32.totalorder %s160, %s163
    %p172 = scmp.eq.s32.totalorder %s19, 1
    %p173 = por %p171, %p172
    %p174 = scmp.ne.s32.totalorder %s163, %s164
    %p175 = scmp.eq.s32.totalorder %s19, 0
    %p176 = por %p174, %p175
    %p177 = scmp.ne.s32.totalorder %s163, %s164
    %p178 = scmp.eq.s32.totalorder %s20, 1
    %p179 = por %p177, %p178
    %p181 = scmp.ne.s32.totalorder %s164, %s180
    %p182 = scmp.eq.s32.totalorder %s20, 0
    %p183 = por %p181, %p182
    %s184 = ssub.s32 %s14, %s21
    %p185 = scmp.eq.s32.totalorder %s184, 0
    %s187 = sadd.s32 %s186, 1
    %s188 = scalar_select %p185, %s186, %s187
    %p191 = pneg %p185
    %p192 = scmp.eq.s32.totalorder %s14, 1
    %p193 = por %p191, %p192
    %p194 = scmp.ne.s32.totalorder %s186, %s189
    %p195 = scmp.eq.s32.totalorder %s14, 0
    %p196 = por %p194, %p195
    %p197 = scmp.ne.s32.totalorder %s186, %s189
    %p198 = scmp.eq.s32.totalorder %s19, 1
    %p199 = por %p197, %p198
    %p200 = scmp.ne.s32.totalorder %s189, %s190
    %p201 = scmp.eq.s32.totalorder %s19, 0
    %p202 = por %p200, %p201
    %p203 = scmp.ne.s32.totalorder %s189, %s190
    %p204 = scmp.eq.s32.totalorder %s20, 1
    %p205 = por %p203, %p204
    %p207 = scmp.ne.s32.totalorder %s190, %s206
    %p208 = scmp.eq.s32.totalorder %s20, 0
    %p209 = por %p207, %p208
    %p210 = scmp.le.s32.totalorder 1, %s14
    %p211 = scmp.lt.s32.totalorder %s14, 3
    %p212 = pnand %p210, %p211
    %p213 = pneg %p212
    // Predicated region
    $region9: #{downsample_forward.4} parent=5 // pred_check
      _
    $region10: #{downsample_forward.4} parent=5 // pred_check_branch
      %215 = sbr.rel (%p212) target = $region12
    $region11: #{downsample_forward.4} parent=5 // pred_region
      %s216 = ssub.s32 %s14, 1
      // Predicated region
      $region13: #{downsample_forward.4} parent=11 // pred_check
        %p217 = pneg %p61
      $region14: #{downsample_forward.4} parent=11 // pred_check_branch
        %219 = sbr.rel (%p217) target = $region16
      $region15: #{downsample_forward.4} parent=11 // pred_region
        _
      $region16: #{downsample_forward.4} parent=11 // pred_fallthru
        _
      // Predicated region
      $region17: #{downsample_forward.4} parent=11 // pred_check
        %p220 = pneg %p82
      $region18: #{downsample_forward.4} parent=11 // pred_check_branch
        %222 = sbr.rel (%p220) target = $region20
      $region19: #{downsample_forward.4} parent=11 // pred_region
        _
      $region20: #{downsample_forward.4} parent=11 // pred_fallthru
        _
      // Predicated region
      $region21: #{downsample_forward.4} parent=11 // pred_check
        %p223 = pneg %p103
      $region22: #{downsample_forward.4} parent=11 // pred_check_branch
        %225 = sbr.rel (%p223) target = $region24
      $region23: #{downsample_forward.4} parent=11 // pred_region
        _
      $region24: #{downsample_forward.4} parent=11 // pred_fallthru
        _
      // Predicated region
      $region25: #{downsample_forward.4} parent=11 // pred_check
        %p226 = pneg %p124
      $region26: #{downsample_forward.4} parent=11 // pred_check_branch
        %228 = sbr.rel (%p226) target = $region28
      $region27: #{downsample_forward.4} parent=11 // pred_region
        _
      $region28: #{downsample_forward.4} parent=11 // pred_fallthru
        _
    $region12: #{downsample_forward.4} parent=5 // pred_fallthru
      _
    %p229 = scmp.lt.s32.totalorder %s14, 2
    // Predicated region
    $region29: #{downsample_forward.4} parent=5 // pred_check
      %p230 = pneg %p229
    $region30: #{downsample_forward.4} parent=5 // pred_check_branch
      %232 = sbr.rel (%p230) target = $region32
    $region31: #{downsample_forward.4} parent=5 // pred_region
      // Predicated region
      $region33: #{downsample_forward.4} parent=31 // pred_check
        %p233 = pneg %p34
      $region34: #{downsample_forward.4} parent=31 // pred_check_branch
        %235 = sbr.rel (%p233) target = $region36
      $region35: #{downsample_forward.4} parent=31 // pred_region
        %p236 = scmp.lt.s32.totalorder %s14, 1
        %s237 = scalar_select %p236, %s14, 1
        %s238 = smul.addr %s237, 8
        %s239 = smul.addr %s238, 8
        %s240 = scalar_lea.vmem %s0, %s239
      $region36: #{downsample_forward.4} parent=31 // pred_fallthru
        _
    $region32: #{downsample_forward.4} parent=5 // pred_fallthru
      _
    %p241 = scmp.le.s32.totalorder 1, %s14
    %p242 = scmp.lt.s32.totalorder %s14, 3
    %p243 = pnand %p241, %p242
    %p244 = pneg %p243
    // Predicated region
    $region37: #{downsample_forward.4} parent=5 // pred_check
      _
    $region38: #{downsample_forward.4} parent=5 // pred_check_branch
      %246 = sbr.rel (%p243) target = $region40
    $region39: #{downsample_forward.4} parent=5 // pred_region
      %s247 = ssub.s32 %s14, 1
      %p248 = scmp.lt.s32.totalorder %s19, 1
      %s249 = scalar_select %p248, %s19, 1
      %s250 = smul.addr %s249, 8
      %s251 = smul.addr %s250, 8
      %s252 = scalar_lea.vmem %s0, %s251
      %p253 = pneg %p40
      %p254 = pneg %p37
      %p255 = pneg %p61
      %p256 = pneg %p58
      %p257 = pneg %p82
      %p258 = pneg %p79
      %p259 = pneg %p103
      %p260 = pneg %p100
      %p261 = pneg %p124
      %p262 = pneg %p121
      %p263 = pneg %p150
      %p264 = pneg %p147
      %p265 = scmp.lt.s32.totalorder %s19, 1
      %s266 = scalar_select %p265, %s19, 1
      %s267 = smul.addr %s266, 8
      %s268 = smul.addr %s267, 8
      %s269 = scalar_lea.vmem %s5, %s268
      %p270 = pneg %p176
      %p271 = pneg %p173
      %p272 = scmp.lt.s32.totalorder %s19, 1
      %s273 = scalar_select %p272, %s19, 1
      %s274 = scalar_lea.vmem %s6, %s273
      %p275 = pneg %p202
      %p276 = pneg %p199
      %p277 = scmp.lt.s32.totalorder %s19, 1
      %s278 = scalar_select %p277, %s19, 1
      %s279 = scalar_lea.vmem %s7, %s278
      %p280 = scmp.lt.s32.totalorder %s19, 1
      %s281 = scalar_select %p280, %s19, 1
      %s282 = smul.addr %s281, 8
      %s283 = smul.addr %s282, 8
      %s284 = scalar_lea.vmem %s0, %s283
      %p285 = scmp.lt.s32.totalorder %s19, 1
      %s286 = scalar_select %p285, %s19, 1
      %s287 = smul.addr %s286, 8
      %s288 = smul.addr %s287, 8
      %s289 = scalar_lea.vmem %s5, %s288
      %p290 = scmp.lt.s32.totalorder %s19, 1
      %s291 = scalar_select %p290, %s19, 1
      %s292 = scalar_lea.vmem %s6, %s291
      %p293 = scmp.lt.s32.totalorder %s19, 1
      %s294 = scalar_select %p293, %s19, 1
      %s295 = scalar_lea.vmem %s7, %s294
      %v297 = vld [vmem:[%s284] sm:$0xff]
      %v298 = vld [vmem:[%s284 + $0x8] sm:$0xff]
      %v299 = vld [vmem:[%s284 + $0x10] sm:$0xff]
      %v300 = vld [vmem:[%s284 + $0x18] sm:$0xff]
      %v301 = vld [vmem:[%s284 + $0x20] sm:$0xff]
      %v302 = vld [vmem:[%s284 + $0x28] sm:$0xff]
      %v303 = vld [vmem:[%s284 + $0x30] sm:$0xff]
      %v304 = vld [vmem:[%s284 + $0x38] sm:$0xff]
      %v305 = vld [vmem:[%s1] sm:$0x1]
      %v307 = vlaneseq
      %v308 = vshrl.u32 %v307, 7
      %v309 = vsub.s32 0, %v308
      %v310 = vrot.slane %v305, %v309
      %v312 = vmul.f32 %v297, %v310
      %v313 = vmul.f32 %v298, %v310
      %v314 = vmul.f32 %v299, %v310
      %v315 = vmul.f32 %v300, %v310
      %v316 = vmul.f32 %v301, %v310
      %v317 = vmul.f32 %v302, %v310
      %v318 = vmul.f32 %v303, %v310
      %v319 = vmul.f32 %v304, %v310
      %v320 = vld [vmem:[%s2] sm:$0x1]
      %v322 = vlaneseq
      %v323 = vshrl.u32 %v322, 7
      %v324 = vsub.s32 0, %v323
      %v325 = vrot.slane %v320, %v324
      %v327 = vadd.f32 %v312, %v325
      %v328 = vadd.f32 %v313, %v325
      %v329 = vadd.f32 %v314, %v325
      %v330 = vadd.f32 %v315, %v325
      %v331 = vadd.f32 %v316, %v325
      %v332 = vadd.f32 %v317, %v325
      %v333 = vadd.f32 %v318, %v325
      %v334 = vadd.f32 %v319, %v325
      %v335 = vmax.f32 %v327, 0.0
      %v336 = vmax.f32 %v328, 0.0
      %v337 = vmax.f32 %v329, 0.0
      %v338 = vmax.f32 %v330, 0.0
      %v339 = vmax.f32 %v331, 0.0
      %v340 = vmax.f32 %v332, 0.0
      %v341 = vmax.f32 %v333, 0.0
      %v342 = vmax.f32 %v334, 0.0
      %vm343 = vcmask 64512
      %344 = vst.msk [vmem:[#allocation2] sm:$0xff] %vm343, 0.0
      %vm345 = vcmask 58368
      %346 = vst.msk [vmem:[#allocation2 + $0x8] sm:$0x3] %vm345, 0.0
      %347 = vst.msk [vmem:[#allocation2 + $0x10] sm:$0xff] %vm343, 0.0
      %348 = vst.msk [vmem:[#allocation2 + $0x18] sm:$0x3] %vm345, 0.0
      %349 = vst.msk [vmem:[#allocation2 + $0x20] sm:$0xff] %vm343, 0.0
      %350 = vst.msk [vmem:[#allocation2 + $0x28] sm:$0x3] %vm345, 0.0
      %351 = vst.msk [vmem:[#allocation2 + $0x30] sm:$0xff] %vm343, 0.0
      %352 = vst.msk [vmem:[#allocation2 + $0x38] sm:$0x3] %vm345, 0.0
      %353 = vst.msk [vmem:[#allocation2 + $0x40] sm:$0xff] %vm343, 0.0
      %354 = vst.msk [vmem:[#allocation2 + $0x48] sm:$0x3] %vm345, 0.0
      %355 = vst.msk [vmem:[#allocation2 + $0x50] sm:$0xff] %vm343, 0.0
      %356 = vst.msk [vmem:[#allocation2 + $0x58] sm:$0x3] %vm345, 0.0
      %357 = vst.msk [vmem:[#allocation2 + $0x60] sm:$0xff] %vm343, 0.0
      %358 = vst.msk [vmem:[#allocation2 + $0x68] sm:$0x3] %vm345, 0.0
      %359 = vst.msk [vmem:[#allocation2 + $0x70] sm:$0xff] %vm343, 0.0
      %360 = vst.msk [vmem:[#allocation2 + $0x78] sm:$0x3] %vm345, 0.0
      %361 = vst.msk [vmem:[#allocation2 + $0x80] sm:$0xff] %vm343, 0.0
      %362 = vst.msk [vmem:[#allocation2 + $0x88] sm:$0x3] %vm345, 0.0
      %363 = vst.msk [vmem:[#allocation2 + $0x90] sm:$0xff] %vm343, 0.0
      %364 = vst.msk [vmem:[#allocation2 + $0x98] sm:$0x3] %vm345, 0.0
      %s365 = scalar_lea.vmem [#allocation2], 16
      %366 = vst.msk [vmem:[%s365 + $0x1] sm:$0xff] %vm343, %v335
      %367 = vst.msk [vmem:[%s365 + $0x11] sm:$0xff] %vm343, %v336
      %368 = vst.msk [vmem:[%s365 + $0x21] sm:$0xff] %vm343, %v337
      %369 = vst.msk [vmem:[%s365 + $0x31] sm:$0xff] %vm343, %v338
      %370 = vst.msk [vmem:[%s365 + $0x41] sm:$0xff] %vm343, %v339
      %371 = vst.msk [vmem:[%s365 + $0x51] sm:$0xff] %vm343, %v340
      %372 = vst.msk [vmem:[%s365 + $0x61] sm:$0xff] %vm343, %v341
      %373 = vst.msk [vmem:[%s365 + $0x71] sm:$0xff] %vm343, %v342
      %v374 = vld [vmem:[#allocation2] sm:$0xff]
      %v375 = vld [vmem:[#allocation2 + $0x10] sm:$0xff]
      %v376 = vld [vmem:[#allocation2 + $0x20] sm:$0xff]
      %v377 = vld [vmem:[#allocation2 + $0x30] sm:$0xff]
      %v378 = vld [vmem:[#allocation2 + $0x40] sm:$0xff]
      %v379 = vld [vmem:[#allocation2 + $0x50] sm:$0xff]
      %v380 = vld [vmem:[#allocation2 + $0x60] sm:$0xff]
      %v381 = vld [vmem:[#allocation2 + $0x70] sm:$0xff]
      %v382 = vld [vmem:[#allocation2 + $0x1] sm:$0xff]
      %v383 = vld [vmem:[#allocation2 + $0x11] sm:$0xff]
      %v384 = vld [vmem:[#allocation2 + $0x21] sm:$0xff]
      %v385 = vld [vmem:[#allocation2 + $0x31] sm:$0xff]
      %v386 = vld [vmem:[#allocation2 + $0x41] sm:$0xff]
      %v387 = vld [vmem:[#allocation2 + $0x51] sm:$0xff]
      %v388 = vld [vmem:[#allocation2 + $0x61] sm:$0xff]
      %v389 = vld [vmem:[#allocation2 + $0x71] sm:$0xff]
      %v390 = vld [vmem:[#allocation2 + $0x2] sm:$0xff]
      %v391 = vld [vmem:[#allocation2 + $0x12] sm:$0xff]
      %v392 = vld [vmem:[#allocation2 + $0x22] sm:$0xff]
      %v393 = vld [vmem:[#allocation2 + $0x32] sm:$0xff]
      %v394 = vld [vmem:[#allocation2 + $0x42] sm:$0xff]
      %v395 = vld [vmem:[#allocation2 + $0x52] sm:$0xff]
      %v396 = vld [vmem:[#allocation2 + $0x62] sm:$0xff]
      %v397 = vld [vmem:[#allocation2 + $0x72] sm:$0xff]
      %v398 = vld [vmem:[%s365] sm:$0xff]
      %v399 = vld [vmem:[%s365 + $0x10] sm:$0xff]
      %v400 = vld [vmem:[%s365 + $0x20] sm:$0xff]
      %v401 = vld [vmem:[%s365 + $0x30] sm:$0xff]
      %v402 = vld [vmem:[%s365 + $0x40] sm:$0xff]
      %v403 = vld [vmem:[%s365 + $0x50] sm:$0xff]
      %v404 = vld [vmem:[%s365 + $0x60] sm:$0xff]
      %v405 = vld [vmem:[%s365 + $0x70] sm:$0xff]
      %v406 = vld [vmem:[%s365 + $0x1] sm:$0xff]
      %v407 = vld [vmem:[%s365 + $0x11] sm:$0xff]
      %v408 = vld [vmem:[%s365 + $0x21] sm:$0xff]
      %v409 = vld [vmem:[%s365 + $0x31] sm:$0xff]
      %v410 = vld [vmem:[%s365 + $0x41] sm:$0xff]
      %v411 = vld [vmem:[%s365 + $0x51] sm:$0xff]
      %v412 = vld [vmem:[%s365 + $0x61] sm:$0xff]
      %v413 = vld [vmem:[%s365 + $0x71] sm:$0xff]
      %v414 = vld [vmem:[%s365 + $0x2] sm:$0xff]
      %v415 = vld [vmem:[%s365 + $0x12] sm:$0xff]
      %v416 = vld [vmem:[%s365 + $0x22] sm:$0xff]
      %v417 = vld [vmem:[%s365 + $0x32] sm:$0xff]
      %v418 = vld [vmem:[%s365 + $0x42] sm:$0xff]
      %v419 = vld [vmem:[%s365 + $0x52] sm:$0xff]
      %v420 = vld [vmem:[%s365 + $0x62] sm:$0xff]
      %v421 = vld [vmem:[%s365 + $0x72] sm:$0xff]
      %s422 = scalar_lea.vmem [#allocation2], 32
      %v423 = vld [vmem:[%s422] sm:$0xff]
      %v424 = vld [vmem:[%s422 + $0x10] sm:$0xff]
      %v425 = vld [vmem:[%s422 + $0x20] sm:$0xff]
      %v426 = vld [vmem:[%s422 + $0x30] sm:$0xff]
      %v427 = vld [vmem:[%s422 + $0x40] sm:$0xff]
      %v428 = vld [vmem:[%s422 + $0x50] sm:$0xff]
      %v429 = vld [vmem:[%s422 + $0x60] sm:$0xff]
      %v430 = vld [vmem:[%s422 + $0x70] sm:$0xff]
      %v431 = vld [vmem:[%s422 + $0x1] sm:$0xff]
      %v432 = vld [vmem:[%s422 + $0x11] sm:$0xff]
      %v433 = vld [vmem:[%s422 + $0x21] sm:$0xff]
      %v434 = vld [vmem:[%s422 + $0x31] sm:$0xff]
      %v435 = vld [vmem:[%s422 + $0x41] sm:$0xff]
      %v436 = vld [vmem:[%s422 + $0x51] sm:$0xff]
      %v437 = vld [vmem:[%s422 + $0x61] sm:$0xff]
      %v438 = vld [vmem:[%s422 + $0x71] sm:$0xff]
      %v439 = vld [vmem:[%s422 + $0x2] sm:$0xff]
      %v440 = vld [vmem:[%s422 + $0x12] sm:$0xff]
      %v441 = vld [vmem:[%s422 + $0x22] sm:$0xff]
      %v442 = vld [vmem:[%s422 + $0x32] sm:$0xff]
      %v443 = vld [vmem:[%s422 + $0x42] sm:$0xff]
      %v444 = vld [vmem:[%s422 + $0x52] sm:$0xff]
      %v445 = vld [vmem:[%s422 + $0x62] sm:$0xff]
      %v446 = vld [vmem:[%s422 + $0x72] sm:$0xff]
      %455 = vrot.lane.b32.xlu0 %v382, 8
      %v456 = vpop.permute.xlu0 %455
      %457 = vrot.lane.b32.xlu0 %v383, 8
      %v458 = vpop.permute.xlu0 %457
      %459 = vrot.lane.b32.xlu0 %v384, 8
      %v460 = vpop.permute.xlu0 %459
      %461 = vrot.lane.b32.xlu0 %v385, 8
      %v462 = vpop.permute.xlu0 %461
      %463 = vrot.lane.b32.xlu0 %v386, 8
      %v464 = vpop.permute.xlu0 %463
      %465 = vrot.lane.b32.xlu0 %v387, 8
      %v466 = vpop.permute.xlu0 %465
      %467 = vrot.lane.b32.xlu0 %v388, 8
      %v468 = vpop.permute.xlu0 %467
      %469 = vrot.lane.b32.xlu0 %v389, 8
      %v470 = vpop.permute.xlu0 %469
      %487 = vrot.lane.b32.xlu0 %v390, 16
      %v488 = vpop.permute.xlu0 %487
      %489 = vrot.lane.b32.xlu0 %v391, 16
      %v490 = vpop.permute.xlu0 %489
      %491 = vrot.lane.b32.xlu0 %v392, 16
      %v492 = vpop.permute.xlu0 %491
      %493 = vrot.lane.b32.xlu0 %v393, 16
      %v494 = vpop.permute.xlu0 %493
      %495 = vrot.lane.b32.xlu0 %v394, 16
      %v496 = vpop.permute.xlu0 %495
      %497 = vrot.lane.b32.xlu0 %v395, 16
      %v498 = vpop.permute.xlu0 %497
      %499 = vrot.lane.b32.xlu0 %v396, 16
      %v500 = vpop.permute.xlu0 %499
      %501 = vrot.lane.b32.xlu0 %v397, 16
      %v502 = vpop.permute.xlu0 %501
      %519 = vrot.lane.b32.xlu0 %v398, 24
      %v520 = vpop.permute.xlu0 %519
      %521 = vrot.lane.b32.xlu0 %v399, 24
      %v522 = vpop.permute.xlu0 %521
      %523 = vrot.lane.b32.xlu0 %v400, 24
      %v524 = vpop.permute.xlu0 %523
      %525 = vrot.lane.b32.xlu0 %v401, 24
      %v526 = vpop.permute.xlu0 %525
      %527 = vrot.lane.b32.xlu0 %v402, 24
      %v528 = vpop.permute.xlu0 %527
      %529 = vrot.lane.b32.xlu0 %v403, 24
      %v530 = vpop.permute.xlu0 %529
      %531 = vrot.lane.b32.xlu0 %v404, 24
      %v532 = vpop.permute.xlu0 %531
      %533 = vrot.lane.b32.xlu0 %v405, 24
      %v534 = vpop.permute.xlu0 %533
      %551 = vrot.lane.b32.xlu0 %v406, 32
      %v552 = vpop.permute.xlu0 %551
      %553 = vrot.lane.b32.xlu0 %v407, 32
      %v554 = vpop.permute.xlu0 %553
      %555 = vrot.lane.b32.xlu0 %v408, 32
      %v556 = vpop.permute.xlu0 %555
      %557 = vrot.lane.b32.xlu0 %v409, 32
      %v558 = vpop.permute.xlu0 %557
      %559 = vrot.lane.b32.xlu0 %v410, 32
      %v560 = vpop.permute.xlu0 %559
      %561 = vrot.lane.b32.xlu0 %v411, 32
      %v562 = vpop.permute.xlu0 %561
      %563 = vrot.lane.b32.xlu0 %v412, 32
      %v564 = vpop.permute.xlu0 %563
      %565 = vrot.lane.b32.xlu0 %v413, 32
      %v566 = vpop.permute.xlu0 %565
      %583 = vrot.lane.b32.xlu0 %v414, 40
      %v584 = vpop.permute.xlu0 %583
      %585 = vrot.lane.b32.xlu0 %v415, 40
      %v586 = vpop.permute.xlu0 %585
      %587 = vrot.lane.b32.xlu0 %v416, 40
      %v588 = vpop.permute.xlu0 %587
      %589 = vrot.lane.b32.xlu0 %v417, 40
      %v590 = vpop.permute.xlu0 %589
      %591 = vrot.lane.b32.xlu0 %v418, 40
      %v592 = vpop.permute.xlu0 %591
      %593 = vrot.lane.b32.xlu0 %v419, 40
      %v594 = vpop.permute.xlu0 %593
      %595 = vrot.lane.b32.xlu0 %v420, 40
      %v596 = vpop.permute.xlu0 %595
      %597 = vrot.lane.b32.xlu0 %v421, 40
      %v598 = vpop.permute.xlu0 %597
      %615 = vrot.lane.b32.xlu0 %v423, 48
      %v616 = vpop.permute.xlu0 %615
      %617 = vrot.lane.b32.xlu0 %v424, 48
      %v618 = vpop.permute.xlu0 %617
      %619 = vrot.lane.b32.xlu0 %v425, 48
      %v620 = vpop.permute.xlu0 %619
      %621 = vrot.lane.b32.xlu0 %v426, 48
      %v622 = vpop.permute.xlu0 %621
      %623 = vrot.lane.b32.xlu0 %v427, 48
      %v624 = vpop.permute.xlu0 %623
      %625 = vrot.lane.b32.xlu0 %v428, 48
      %v626 = vpop.permute.xlu0 %625
      %627 = vrot.lane.b32.xlu0 %v429, 48
      %v628 = vpop.permute.xlu0 %627
      %629 = vrot.lane.b32.xlu0 %v430, 48
      %v630 = vpop.permute.xlu0 %629
      %647 = vrot.lane.b32.xlu0 %v431, 56
      %v648 = vpop.permute.xlu0 %647
      %649 = vrot.lane.b32.xlu0 %v432, 56
      %v650 = vpop.permute.xlu0 %649
      %651 = vrot.lane.b32.xlu0 %v433, 56
      %v652 = vpop.permute.xlu0 %651
      %653 = vrot.lane.b32.xlu0 %v434, 56
      %v654 = vpop.permute.xlu0 %653
      %655 = vrot.lane.b32.xlu0 %v435, 56
      %v656 = vpop.permute.xlu0 %655
      %657 = vrot.lane.b32.xlu0 %v436, 56
      %v658 = vpop.permute.xlu0 %657
      %659 = vrot.lane.b32.xlu0 %v437, 56
      %v660 = vpop.permute.xlu0 %659
      %661 = vrot.lane.b32.xlu0 %v438, 56
      %v662 = vpop.permute.xlu0 %661
      %679 = vrot.lane.b32.xlu0 %v439, 64
      %v680 = vpop.permute.xlu0 %679
      %681 = vrot.lane.b32.xlu0 %v440, 64
      %v682 = vpop.permute.xlu0 %681
      %683 = vrot.lane.b32.xlu0 %v441, 64
      %v684 = vpop.permute.xlu0 %683
      %685 = vrot.lane.b32.xlu0 %v442, 64
      %v686 = vpop.permute.xlu0 %685
      %687 = vrot.lane.b32.xlu0 %v443, 64
      %v688 = vpop.permute.xlu0 %687
      %689 = vrot.lane.b32.xlu0 %v444, 64
      %v690 = vpop.permute.xlu0 %689
      %691 = vrot.lane.b32.xlu0 %v445, 64
      %v692 = vpop.permute.xlu0 %691
      %693 = vrot.lane.b32.xlu0 %v446, 64
      %v694 = vpop.permute.xlu0 %693
      %v703 = vsel %vm343, %v374, %v456
      %v704 = vsel %vm343, %v375, %v458
      %v705 = vsel %vm343, %v376, %v460
      %v706 = vsel %vm343, %v377, %v462
      %v707 = vsel %vm343, %v378, %v464
      %v708 = vsel %vm343, %v379, %v466
      %v709 = vsel %vm343, %v380, %v468
      %v710 = vsel %vm343, %v381, %v470
      %vm711 = vcmask 130048
      %v712 = vsel %vm711, %v703, %v488
      %v713 = vsel %vm711, %v704, %v490
      %v714 = vsel %vm711, %v705, %v492
      %v715 = vsel %vm711, %v706, %v494
      %v716 = vsel %vm711, %v707, %v496
      %v717 = vsel %vm711, %v708, %v498
      %v718 = vsel %vm711, %v709, %v500
      %v719 = vsel %vm711, %v710, %v502
      %vm720 = vcmask 195584
      %v721 = vsel %vm720, %v712, %v520
      %v722 = vsel %vm720, %v713, %v522
      %v723 = vsel %vm720, %v714, %v524
      %v724 = vsel %vm720, %v715, %v526
      %v725 = vsel %vm720, %v716, %v528
      %v726 = vsel %vm720, %v717, %v530
      %v727 = vsel %vm720, %v718, %v532
      %v728 = vsel %vm720, %v719, %v534
      %vm729 = vcmask 261120
      %v730 = vsel %vm729, %v721, %v552
      %v731 = vsel %vm729, %v722, %v554
      %v732 = vsel %vm729, %v723, %v556
      %v733 = vsel %vm729, %v724, %v558
      %v734 = vsel %vm729, %v725, %v560
      %v735 = vsel %vm729, %v726, %v562
      %v736 = vsel %vm729, %v727, %v564
      %v737 = vsel %vm729, %v728, %v566
      %vm738 = vcmask 326656
      %v739 = vsel %vm738, %v730, %v584
      %v740 = vsel %vm738, %v731, %v586
      %v741 = vsel %vm738, %v732, %v588
      %v742 = vsel %vm738, %v733, %v590
      %v743 = vsel %vm738, %v734, %v592
      %v744 = vsel %vm738, %v735, %v594
      %v745 = vsel %vm738, %v736, %v596
      %v746 = vsel %vm738, %v737, %v598
      %vm747 = vcmask 392192
      %v748 = vsel %vm747, %v739, %v616
      %v749 = vsel %vm747, %v740, %v618
      %v750 = vsel %vm747, %v741, %v620
      %v751 = vsel %vm747, %v742, %v622
      %v752 = vsel %vm747, %v743, %v624
      %v753 = vsel %vm747, %v744, %v626
      %v754 = vsel %vm747, %v745, %v628
      %v755 = vsel %vm747, %v746, %v630
      %vm756 = vcmask 457728
      %v757 = vsel %vm756, %v748, %v648
      %v758 = vsel %vm756, %v749, %v650
      %v759 = vsel %vm756, %v750, %v652
      %v760 = vsel %vm756, %v751, %v654
      %v761 = vsel %vm756, %v752, %v656
      %v762 = vsel %vm756, %v753, %v658
      %v763 = vsel %vm756, %v754, %v660
      %v764 = vsel %vm756, %v755, %v662
      %vm765 = vcmask 523264
      %v766 = vsel %vm765, %v757, %v680
      %v767 = vsel %vm765, %v758, %v682
      %v768 = vsel %vm765, %v759, %v684
      %v769 = vsel %vm765, %v760, %v686
      %v770 = vsel %vm765, %v761, %v688
      %v771 = vsel %vm765, %v762, %v690
      %v772 = vsel %vm765, %v763, %v692
      %v773 = vsel %vm765, %v764, %v694
      %v774 = vpack.c.bf16 %v767, %v766
      %v775 = vpack.c.bf16 %v769, %v768
      %v776 = vpack.c.bf16 %v771, %v770
      %v777 = vpack.c.bf16 %v773, %v772
      %v778 = vld [vmem:[%s3] sm:$0xf]
      %v779 = vld [vmem:[%s3 + $0x4] sm:$0xf]
      %v780 = vld [vmem:[%s3 + $0x8] sm:$0xf]
      %v781 = vld [vmem:[%s3 + $0xc] sm:$0xf]
      %v782 = vld [vmem:[%s3 + $0x10] sm:$0xf]
      %v783 = vld [vmem:[%s3 + $0x14] sm:$0xf]
      %v784 = vld [vmem:[%s3 + $0x18] sm:$0xf]
      %v785 = vld [vmem:[%s3 + $0x1c] sm:$0xf]
      %v786 = vld [vmem:[%s3 + $0x20] sm:$0xf]
      %v787 = vld [vmem:[%s4] sm:$0x1]
      %v789 = vlaneseq
      %v790 = vshrl.u32 %v789, 7
      %v791 = vsub.s32 0, %v790
      %v792 = vrot.slane %v787, %v791
      %v803 = vunpack.c.l.b16 %v778
      %v804 = vunpack.c.l.b16 %v779
      %v805 = vunpack.c.l.b16 %v780
      %v806 = vunpack.c.l.b16 %v781
      %v807 = vunpack.c.l.b16 %v782
      %v808 = vunpack.c.l.b16 %v783
      %v809 = vunpack.c.l.b16 %v784
      %v810 = vunpack.c.l.b16 %v785
      %v811 = vunpack.c.l.b16 %v786
      %v812 = vpack.c.b16 %v804, %v803
      %v813 = vpack.c.b16 %v806, %v805
      %v814 = vpack.c.b16 %v808, %v807
      %v815 = vpack.c.b16 %v810, %v809
      %v816 = vpack.c.b16 %v811, %v811
      %vm821 = vcmask 588800
      %v823 = vsel %vm821, %v774, 0
      %v826 = vsel %vm821, %v775, 0
      %v829 = vsel %vm821, %v776, 0
      %v832 = vsel %vm821, %v777, 0
      %vm834 = vcmask 1043456
      %v836 = vsel %vm834, %v816, 0
      %838 = vmatprep.subr.bf16.mxu0 0
      %839 = vmatpush1.bf16.msra.mxu0 %v812
      %840 = vmatprep.subr.bf16.mxu0 0
      %841 = vmatpush1.bf16.msra.mxu0 %v813
      %842 = vmatprep.subr.bf16.mxu0 0
      %843 = vmatpush1.bf16.msra.mxu0 %v814
      %844 = vmatprep.subr.bf16.mxu0 0
      %845 = vmatpush1.bf16.msra.mxu0 %v815
      %846 = vmatprep.subr.bf16.mxu0 0
      %847 = vmatpush1.bf16.msra.mxu0 %v836
      %848 = vmatprep.subr.bf16.mxu0 0
      %849 = vmatpush1.bf16.msra.mxu0 0
      %850 = vmatprep.subr.bf16.mxu0 0
      %851 = vmatpush1.bf16.msra.mxu0 0
      %852 = vmatprep.subr.bf16.mxu0 0
      %853 = vmatpush1.bf16.msra.mxu0 0
      %854 = vmatprep.subr.bf16.mxu0 0
      %855 = vmatpush1.bf16.msra.mxu0 0
      %856 = vmatprep.subr.bf16.mxu0 0
      %857 = vmatpush1.bf16.msra.mxu0 0
      %858 = vmatprep.subr.bf16.mxu0 0
      %859 = vmatpush1.bf16.msra.mxu0 0
      %860 = vmatprep.subr.bf16.mxu0 0
      %861 = vmatpush1.bf16.msra.mxu0 0
      %862 = vmatprep.subr.bf16.mxu0 0
      %863 = vmatpush1.bf16.msra.mxu0 0
      %864 = vmatprep.subr.bf16.mxu0 0
      %865 = vmatpush1.bf16.msra.mxu0 0
      %866 = vmatprep.subr.bf16.mxu0 0
      %867 = vmatpush1.bf16.msra.mxu0 0
      %868 = vmatprep.subr.bf16.mxu0 0
      %869 = vmatpush1.bf16.msra.mxu0 0
      %870 = vmatprep.mubr.bf16.mxu0 0
      %871 = vmatmul.mubr.bf16.gmra.mrb[0].mxu0 %v823
      %v872 = vpop.f32.mrb[0].mxu0
      %v873 = vadd.f32 %v792, %v872
      %v874 = vpop.f32.mrb[0].mxu0
      %v875 = vpop.f32.mrb[0].mxu0
      %v876 = vadd.f32 %v792, %v875
      %v877 = vpop.f32.mrb[0].mxu0
      %878 = vmatprep.mubr.bf16.mxu0 0
      %879 = vmatmul.mubr.bf16.gmra.mrb[0].mxu0 %v826
      %v880 = vpop.f32.mrb[0].mxu0
      %v881 = vadd.f32 %v792, %v880
      %v882 = vpop.f32.mrb[0].mxu0
      %v883 = vpop.f32.mrb[0].mxu0
      %v884 = vadd.f32 %v792, %v883
      %v885 = vpop.f32.mrb[0].mxu0
      %886 = vmatprep.mubr.bf16.mxu0 0
      %887 = vmatmul.mubr.bf16.gmra.mrb[0].mxu0 %v829
      %v888 = vpop.f32.mrb[0].mxu0
      %v889 = vadd.f32 %v792, %v888
      %v890 = vpop.f32.mrb[0].mxu0
      %v891 = vpop.f32.mrb[0].mxu0
      %v892 = vadd.f32 %v792, %v891
      %v893 = vpop.f32.mrb[0].mxu0
      %894 = vmatprep.mubr.bf16.mxu0 0
      %895 = vmatmul.mubr.bf16.gmra.mrb[0].mxu0 %v832
      %v896 = vpop.f32.mrb[0].mxu0
      %v897 = vadd.f32 %v792, %v896
      %v898 = vpop.f32.mrb[0].mxu0
      %v899 = vpop.f32.mrb[0].mxu0
      %v900 = vadd.f32 %v792, %v899
      %v901 = vpop.f32.mrb[0].mxu0
      %902 = vdwg.mxu0
      %903 = vst.msk [vmem:[%s289] sm:$0xff] %vm343, %v873
      %904 = vst.msk [vmem:[%s289 + $0x8] sm:$0xff] %vm343, %v876
      %905 = vst.msk [vmem:[%s289 + $0x10] sm:$0xff] %vm343, %v881
      %906 = vst.msk [vmem:[%s289 + $0x18] sm:$0xff] %vm343, %v884
      %907 = vst.msk [vmem:[%s289 + $0x20] sm:$0xff] %vm343, %v889
      %908 = vst.msk [vmem:[%s289 + $0x28] sm:$0xff] %vm343, %v892
      %909 = vst.msk [vmem:[%s289 + $0x30] sm:$0xff] %vm343, %v897
      %910 = vst.msk [vmem:[%s289 + $0x38] sm:$0xff] %vm343, %v900
      %v911 = vsel %vm343, %v873, 0.0
      %v912 = vsel %vm343, %v876, 0.0
      %v913 = vadd.f32 %v911, %v912
      %v914 = vsel %vm343, %v881, 0.0
      %v915 = vadd.f32 %v913, %v914
      %v916 = vsel %vm343, %v884, 0.0
      %v917 = vadd.f32 %v915, %v916
      %v918 = vsel %vm343, %v889, 0.0
      %v919 = vadd.f32 %v917, %v918
      %v920 = vsel %vm343, %v892, 0.0
      %v921 = vadd.f32 %v919, %v920
      %v922 = vsel %vm343, %v897, 0.0
      %v923 = vadd.f32 %v921, %v922
      %v924 = vsel %vm343, %v900, 0.0
      %v925 = vadd.f32 %v923, %v924
      %v926 = vrot.slane %v925, 4
      %v927 = vadd.f32 %v925, %v926
      %v928 = vrot.slane %v927, 2
      %v929 = vadd.f32 %v927, %v928
      %v930 = vrot.slane %v929, 1
      %v931 = vadd.f32 %v929, %v930
      %vm932 = vcmask 57344
      %933 = vst.msk [vmem:[%s292] sm:$0x1] %vm932, %v931
      %v934 = vmul.f32 %v873, %v873
      %v935 = vmul.f32 %v876, %v876
      %v936 = vmul.f32 %v881, %v881
      %v937 = vmul.f32 %v884, %v884
      %v938 = vmul.f32 %v889, %v889
      %v939 = vmul.f32 %v892, %v892
      %v940 = vmul.f32 %v897, %v897
      %v941 = vmul.f32 %v900, %v900
      %v942 = vsel %vm343, %v934, 0.0
      %v943 = vsel %vm343, %v935, 0.0
      %v944 = vadd.f32 %v942, %v943
      %v945 = vsel %vm343, %v936, 0.0
      %v946 = vadd.f32 %v944, %v945
      %v947 = vsel %vm343, %v937, 0.0
      %v948 = vadd.f32 %v946, %v947
      %v949 = vsel %vm343, %v938, 0.0
      %v950 = vadd.f32 %v948, %v949
      %v951 = vsel %vm343, %v939, 0.0
      %v952 = vadd.f32 %v950, %v951
      %v953 = vsel %vm343, %v940, 0.0
      %v954 = vadd.f32 %v952, %v953
      %v955 = vsel %vm343, %v941, 0.0
      %v956 = vadd.f32 %v954, %v955
      %v957 = vrot.slane %v956, 4
      %v958 = vadd.f32 %v956, %v957
      %v959 = vrot.slane %v958, 2
      %v960 = vadd.f32 %v958, %v959
      %v961 = vrot.slane %v960, 1
      %v962 = vadd.f32 %v960, %v961
      %963 = vst.msk [vmem:[%s295] sm:$0x1] %vm932, %v962
      %p964 = scmp.lt.s32.totalorder %s19, 1
      %s965 = scalar_select %p964, %s19, 1
      %s966 = smul.addr %s965, 8
      %s967 = smul.addr %s966, 8
      %s968 = scalar_lea.vmem %s5, %s967
      %p969 = scmp.lt.s32.totalorder %s19, 1
      %s970 = scalar_select %p969, %s19, 1
      %s971 = scalar_lea.vmem %s6, %s970
      %p972 = scmp.lt.s32.totalorder %s19, 1
      %s973 = scalar_select %p972, %s19, 1
      %s974 = scalar_lea.vmem %s7, %s973
      // Predicated region
      $region41: #{downsample_forward.4} parent=39 // pred_check
        %p975 = pneg %p147
      $region42: #{downsample_forward.4} parent=39 // pred_check_branch
        %977 = sbr.rel (%p975) target = $region44
      $region43: #{downsample_forward.4} parent=39 // pred_region
        _
      $region44: #{downsample_forward.4} parent=39 // pred_fallthru
        _
      // Predicated region
      $region45: #{downsample_forward.4} parent=39 // pred_check
        %p978 = pneg %p173
      $region46: #{downsample_forward.4} parent=39 // pred_check_branch
        %980 = sbr.rel (%p978) target = $region48
      $region47: #{downsample_forward.4} parent=39 // pred_region
        _
      $region48: #{downsample_forward.4} parent=39 // pred_fallthru
        _
      // Predicated region
      $region49: #{downsample_forward.4} parent=39 // pred_check
        %p981 = pneg %p199
      $region50: #{downsample_forward.4} parent=39 // pred_check_branch
        %983 = sbr.rel (%p981) target = $region52
      $region51: #{downsample_forward.4} parent=39 // pred_region
        _
      $region52: #{downsample_forward.4} parent=39 // pred_fallthru
        _
    $region40: #{downsample_forward.4} parent=5 // pred_fallthru
      _
    %p984 = scmp.le.s32.totalorder 2, %s14
    // Predicated region
    $region53: #{downsample_forward.4} parent=5 // pred_check
      %p985 = pneg %p984
    $region54: #{downsample_forward.4} parent=5 // pred_check_branch
      %987 = sbr.rel (%p985) target = $region56
    $region55: #{downsample_forward.4} parent=5 // pred_region
      %s988 = ssub.s32 %s14, 2
      // Predicated region
      $region57: #{downsample_forward.4} parent=55 // pred_check
        %p989 = pneg %p153
      $region58: #{downsample_forward.4} parent=55 // pred_check_branch
        %991 = sbr.rel (%p989) target = $region60
      $region59: #{downsample_forward.4} parent=55 // pred_region
        %p992 = scmp.lt.s32.totalorder %s20, 1
        %s993 = scalar_select %p992, %s20, 1
        %s994 = smul.addr %s993, 8
        %s995 = smul.addr %s994, 8
        %s996 = scalar_lea.vmem %s5, %s995
      $region60: #{downsample_forward.4} parent=55 // pred_fallthru
        _
      // Predicated region
      $region61: #{downsample_forward.4} parent=55 // pred_check
        %p997 = pneg %p179
      $region62: #{downsample_forward.4} parent=55 // pred_check_branch
        %999 = sbr.rel (%p997) target = $region64
      $region63: #{downsample_forward.4} parent=55 // pred_region
        %p1000 = scmp.lt.s32.totalorder %s20, 1
        %s1001 = scalar_select %p1000, %s20, 1
        %s1002 = scalar_lea.vmem %s6, %s1001
      $region64: #{downsample_forward.4} parent=55 // pred_fallthru
        _
      // Predicated region
      $region65: #{downsample_forward.4} parent=55 // pred_check
        %p1003 = pneg %p205
      $region66: #{downsample_forward.4} parent=55 // pred_check_branch
        %1005 = sbr.rel (%p1003) target = $region68
      $region67: #{downsample_forward.4} parent=55 // pred_region
        %p1006 = scmp.lt.s32.totalorder %s20, 1
        %s1007 = scalar_select %p1006, %s20, 1
        %s1008 = scalar_lea.vmem %s7, %s1007
      $region68: #{downsample_forward.4} parent=55 // pred_fallthru
        _
    $region56: #{downsample_forward.4} parent=5 // pred_fallthru
      _
  $region6: #{downsample_forward.4} parent=0 // loop_footer
    %s18 = sadd.s32 1, %s14
  $region7: #{downsample_forward.4} parent=0 // loop_footer_branch
    %13 = sbr.rel target = $region3
  $region8: #{downsample_forward.4} parent=0 // loop_exit
    _

</llo_original>
